<compile_context>
chip_gen: v6e
topology: v6e:2x2x1
jax: 0.10.0
libtpu: 0.0.40
codegen_flags: <defaults>
</compile_context>

<pallas_src>
import jax
import jax.numpy as jnp
from jax.experimental import pallas as pl
from jax.experimental.pallas import tpu as pltpu


HIDDEN_SIZE = 128   # multiple of 128 -> lane-aligned gates (module default is 256)
VOCAB_SIZE = 64     # "input_size" of the Encoder
SEQ_LEN = 8         # number of fused timesteps for the test


def _encoder_seq_kernel(tok_ref,     # SMEM (T,) int32  : token ids (scalar prefetch)
                        emb_hbm,     # ANY  (V, H) f32  : embedding table (stays in HBM)
                        wih_ref,     # VMEM (H, 3H) bf16: W_ih^T   [r|z|n]
                        whh_ref,     # VMEM (H, 3H) bf16: W_hh^T   [r|z|n]
                        bcomb_ref,   # VMEM (1, 3H) f32 : b_ih + [b_hh_r, b_hh_z, 0]
                        bhhn_ref,    # VMEM (1, H)  f32 : b_hh (n gate only)
                        h0_ref,      # VMEM (1, H)  f32 : initial hidden
                        out_ref,     # VMEM (T, H)  f32 : per-step hidden (resident)
                        x_buf,       # VMEM scratch (T, H)  f32 : gathered embeddings
                        gi_buf,      # VMEM scratch (T, 3H) f32 : precomputed input proj
                        h_buf,       # VMEM scratch (1, H)  f32 : running hidden
                        sems):       # DMA semaphores (T,)
    T, H = out_ref.shape
    t = pl.program_id(0)

    # ---------------- prologue (runs once, at t == 0) ----------------
    @pl.when(t == 0)
    def _prologue():
        # Gather the T needed embedding rows straight from HBM -- only
        # T * H * 4 bytes of DMA, never the whole table.
        copies = []
        for s in range(T):  # T is small & static -> unrolled
            cp = pltpu.make_async_copy(
                emb_hbm.at[pl.ds(tok_ref[s], 1), :],
                x_buf.at[pl.ds(s, 1), :],
                sems.at[s])
            cp.start()
            copies.append(cp)
        for cp in copies:
            cp.wait()

        # Batched (non-recurrent) input projection for ALL timesteps:
        # one (T, H) @ (H, 3H) MXU matmul, f32 accumulation.
        gi_buf[...] = (
            jnp.dot(x_buf[...].astype(jnp.bfloat16), wih_ref[...],
                    preferred_element_type=jnp.float32)
            + bcomb_ref[...]
        )
        h_buf[...] = h0_ref[...]

    # ---------------- recurrent step t ----------------
    h = h_buf[...]                                           # (1, H) f32
    gh = jnp.dot(h.astype(jnp.bfloat16), whh_ref[...],
                 preferred_element_type=jnp.float32)         # (1, 3H) f32
    gi = gi_buf[pl.ds(t, 1), :]                              # (1, 3H) f32

    # PyTorch nn.GRU gate math (gate order r, z, n); all f32 on the VPU/EUP.
    r = jax.nn.sigmoid(gi[:, 0:H] + gh[:, 0:H])
    z = jax.nn.sigmoid(gi[:, H:2 * H] + gh[:, H:2 * H])
    n = jnp.tanh(gi[:, 2 * H:3 * H] + r * (gh[:, 2 * H:3 * H] + bhhn_ref[...]))
    h_new = (1.0 - z) * n + z * h

    h_buf[...] = h_new
    out_ref[pl.ds(t, 1), :] = h_new


def encoder_forward_sequence(tokens, hidden0, params):
    """Run the Encoder over a sequence of tokens in ONE fused Pallas kernel.

    tokens : (T,) int32, hidden0 : (1, 1, H) f32.
    Returns (outputs (T, 1, H), final_hidden (1, 1, H)) -- identical to calling
    the PyTorch Encoder.forward once per token while threading the hidden.
    """
    emb, wih_t, whh_t, b_comb, b_hh_n = params
    V, H = emb.shape
    T = int(tokens.shape[0])

    toks = jnp.clip(tokens.astype(jnp.int32), 0, V - 1)      # guard OOB token ids
    h0 = jnp.reshape(hidden0, (1, H)).astype(jnp.float32)

    grid_spec = pltpu.PrefetchScalarGridSpec(
        num_scalar_prefetch=1,
        grid=(T,),
        in_specs=[
            pl.BlockSpec(memory_space=pl.ANY),                     # emb (HBM)
            pl.BlockSpec((H, 3 * H), lambda t, toks: (0, 0)),      # W_ih^T (resident)
            pl.BlockSpec((H, 3 * H), lambda t, toks: (0, 0)),      # W_hh^T (resident)
            pl.BlockSpec((1, 3 * H), lambda t, toks: (0, 0)),      # folded bias
            pl.BlockSpec((1, H), lambda t, toks: (0, 0)),          # b_hh (n gate)
            pl.BlockSpec((1, H), lambda t, toks: (0, 0)),          # initial hidden
        ],
        out_specs=pl.BlockSpec((T, H), lambda t, toks: (0, 0)),    # resident output
        scratch_shapes=[
            pltpu.VMEM((T, H), jnp.float32),        # gathered embeddings
            pltpu.VMEM((T, 3 * H), jnp.float32),    # precomputed gi
            pltpu.VMEM((1, H), jnp.float32),        # running hidden
            pltpu.SemaphoreType.DMA((T,)),
        ],
    )

    outputs = pl.pallas_call(
        _encoder_seq_kernel,
        grid_spec=grid_spec,
        out_shape=jax.ShapeDtypeStruct((T, H), jnp.float32),
        compiler_params=pltpu.CompilerParams(
            dimension_semantics=("arbitrary",),     # sequential recurrence
            vmem_limit_bytes=32 * 1024 * 1024,      # explicit, portable v5e/v6e/v7x
        ),
    )(toks, emb, wih_t, whh_t, b_comb, b_hh_n, h0)

    out_seq = outputs.reshape(T, 1, H)
    hidden_final = outputs[T - 1].reshape(1, 1, H)   # last step IS the new hidden
    return out_seq, hidden_final


def encoder_forward(token, hidden, params):
    """Single-step forward matching the PyTorch module exactly:
       output, hidden = gru(embedding(input).view(1,1,-1), hidden)."""
    out_seq, hid = encoder_forward_sequence(jnp.reshape(token, (1,)), hidden, params)
    H = out_seq.shape[-1]
    return out_seq.reshape(1, 1, H), hid


def init_params(key, vocab, hidden):
    """PyTorch-equivalent parameter shapes, stored in kernel layout:
       Embedding(vocab, hidden) ~ N(0,1) f32 (kept in HBM, gathered per row);
       GRU weight_ih/weight_hh (3H, H) ~ U(-k, k) -> stored transposed bf16;
       bias_ih/bias_hh (3H,) ~ U(-k, k) -> r/z parts of b_hh folded into b_ih."""
    k = 1.0 / jnp.sqrt(hidden)
    keys = jax.random.split(key, 5)
    emb = jax.random.normal(keys[0], (vocab, hidden), jnp.float32)
    w_ih = jax.random.uniform(keys[1], (3 * hidden, hidden), jnp.float32, -k, k)
    w_hh = jax.random.uniform(keys[2], (3 * hidden, hidden), jnp.float32, -k, k)
    b_ih = jax.random.uniform(keys[3], (3 * hidden,), jnp.float32, -k, k)
    b_hh = jax.random.uniform(keys[4], (3 * hidden,), jnp.float32, -k, k)

    wih_t = w_ih.T.astype(jnp.bfloat16)                       # (H, 3H)
    whh_t = w_hh.T.astype(jnp.bfloat16)                       # (H, 3H)
    b_comb = (b_ih + jnp.concatenate(
        [b_hh[:2 * hidden], jnp.zeros((hidden,), jnp.float32)])).reshape(1, 3 * hidden)
    b_hh_n = b_hh[2 * hidden:].reshape(1, hidden)
    return emb, wih_t, whh_t, b_comb, b_hh_n


def _reference_forward_sequence(tokens, hidden0, params):
    """Pure-JAX f32 reference of the PyTorch GRU recurrence (same stored
    weights upcast to f32), used only for validation."""
    emb, wih_t, whh_t, b_comb, b_hh_n = params
    H = emb.shape[1]
    wih = wih_t.astype(jnp.float32)
    whh = whh_t.astype(jnp.float32)
    h = hidden0.reshape(1, H).astype(jnp.float32)
    outs = []
    for tok in tokens:
        x = emb[tok].reshape(1, H)
        gi = x @ wih + b_comb                     # includes b_ih + b_hh(r,z)
        gh = h @ whh
        r = jax.nn.sigmoid(gi[:, 0:H] + gh[:, 0:H])
        z = jax.nn.sigmoid(gi[:, H:2 * H] + gh[:, H:2 * H])
        n = jnp.tanh(gi[:, 2 * H:] + r * (gh[:, 2 * H:] + b_hh_n))
        h = (1.0 - z) * n + z * h
        outs.append(h)
    T = len(outs)
    return jnp.stack(outs, 0).reshape(T, 1, H), h.reshape(1, 1, H)


if __name__ == "__main__":
    key = jax.random.PRNGKey(0)
    pkey, tkey = jax.random.split(key)
    params = init_params(pkey, VOCAB_SIZE, HIDDEN_SIZE)

    tokens = jax.random.randint(tkey, (SEQ_LEN,), 0, VOCAB_SIZE, dtype=jnp.int32)
    hidden0 = jnp.zeros((1, 1, HIDDEN_SIZE), jnp.float32)    # initHidden()

    # Fused multi-step kernel (the main, optimized path).
    out_seq, hid = encoder_forward_sequence(tokens, hidden0, params)
    out_seq = jax.block_until_ready(out_seq)
    hid = jax.block_until_ready(hid)

    ref_out, ref_hid = _reference_forward_sequence(tokens, hidden0, params)
    assert out_seq.shape == (SEQ_LEN, 1, HIDDEN_SIZE)
    assert hid.shape == (1, 1, HIDDEN_SIZE)
    assert jnp.allclose(out_seq, ref_out, atol=2e-2), "sequence output mismatch"
    assert jnp.allclose(hid, ref_hid, atol=2e-2), "final hidden mismatch"

    # Single-step call with the exact PyTorch forward signature / shapes.
    out1, hid1 = encoder_forward(tokens[0], hidden0, params)
    out1 = jax.block_until_ready(out1)
    ref1_out, ref1_hid = _reference_forward_sequence(tokens[:1], hidden0, params)
    assert out1.shape == (1, 1, HIDDEN_SIZE) and hid1.shape == (1, 1, HIDDEN_SIZE)
    assert jnp.allclose(out1, ref1_out.reshape(1, 1, -1), atol=2e-2)
    assert jnp.allclose(hid1, ref1_hid, atol=2e-2)

    print("KERNEL_OK")
</pallas_src>

<mosaic_0001>
module attributes {stable_mosaic.version = 11 : i64} {
  func.func @_encoder_seq_kernel(%arg0: i32, %arg1: memref<8xi32, #tpu.memory_space<smem>>, %arg2: memref<64x128xf32, #tpu.memory_space<any>>, %arg3: memref<128x384xbf16, #tpu.memory_space<vmem>>, %arg4: memref<128x384xbf16, #tpu.memory_space<vmem>>, %arg5: memref<1x384xf32, #tpu.memory_space<vmem>>, %arg6: memref<1x128xf32, #tpu.memory_space<vmem>>, %arg7: memref<1x128xf32, #tpu.memory_space<vmem>>, %arg8: memref<8x128xf32, #tpu.memory_space<vmem>>, %arg9: memref<8x128xf32, #tpu.memory_space<vmem>>, %arg10: memref<8x384xf32, #tpu.memory_space<vmem>>, %arg11: memref<1x128xf32, #tpu.memory_space<vmem>>, %arg12: memref<8x!tpu.dma_semaphore, #tpu.memory_space<semaphore_mem>>) attributes {dimension_semantics = [#tpu.dimension_semantics<arbitrary>], iteration_bounds = array<i64: 8>, scalar_prefetch = 1 : i64, scratch_operands = 4 : i64, tpu.core_type = #tpu.core_type<tc>, window_params = [{}, {pipeline_mode = #tpu.pipeline_mode<synchronous>, transform_indices = @transform_1, window_bounds = array<i64: 128, 384>}, {pipeline_mode = #tpu.pipeline_mode<synchronous>, transform_indices = @transform_2, window_bounds = array<i64: 128, 384>}, {pipeline_mode = #tpu.pipeline_mode<synchronous>, transform_indices = @transform_3, window_bounds = array<i64: 1, 384>}, {pipeline_mode = #tpu.pipeline_mode<synchronous>, transform_indices = @transform_4, window_bounds = array<i64: 1, 128>}, {pipeline_mode = #tpu.pipeline_mode<synchronous>, transform_indices = @transform_5, window_bounds = array<i64: 1, 128>}, {pipeline_mode = #tpu.pipeline_mode<synchronous>, transform_indices = @transform_6, window_bounds = array<i64: 8, 128>}]} {
    %c0_i32 = arith.constant 0 : i32
    %0 = arith.cmpi eq, %arg0, %c0_i32 : i32
    %1 = arith.extui %0 : i1 to i32
    %c0_i32_0 = arith.constant 0 : i32
    %2 = arith.cmpi ne, %1, %c0_i32_0 : i32
    scf.if %2 {
      %c0_13 = arith.constant 0 : index
      %40 = memref.load %arg1[%c0_13] : memref<8xi32, #tpu.memory_space<smem>>
      %c0_i32_14 = arith.constant 0 : i32
      %c0_i32_15 = arith.constant 0 : i32
      %41 = tpu.memref_slice %arg2[%40, %c0_i32_15] : memref<64x128xf32, #tpu.memory_space<any>> -> memref<1x128xf32, #tpu.memory_space<any>>
      %c0_i32_16 = arith.constant 0 : i32
      %c0_i32_17 = arith.constant 0 : i32
      %42 = tpu.memref_slice %arg9[%c0_i32_16, %c0_i32_17] : memref<8x128xf32, #tpu.memory_space<vmem>> -> memref<1x128xf32, #tpu.memory_space<vmem>>
      %43 = tpu.memref_slice %arg12[%c0_i32_14] : memref<8x!tpu.dma_semaphore, #tpu.memory_space<semaphore_mem>> -> memref<1x!tpu.dma_semaphore, #tpu.memory_space<semaphore_mem>>
      %44 = tpu.memref_squeeze %43 : memref<1x!tpu.dma_semaphore, #tpu.memory_space<semaphore_mem>> -> memref<!tpu.dma_semaphore, #tpu.memory_space<semaphore_mem>>
      tpu.enqueue_dma source(%41 : memref<1x128xf32, #tpu.memory_space<any>>) target(%42 : memref<1x128xf32, #tpu.memory_space<vmem>>) target_semaphore(%44 : memref<!tpu.dma_semaphore, #tpu.memory_space<semaphore_mem>>)
      %c1 = arith.constant 1 : index
      %45 = memref.load %arg1[%c1] : memref<8xi32, #tpu.memory_space<smem>>
      %c1_i32 = arith.constant 1 : i32
      %c0_i32_18 = arith.constant 0 : i32
      %46 = tpu.memref_slice %arg2[%45, %c0_i32_18] : memref<64x128xf32, #tpu.memory_space<any>> -> memref<1x128xf32, #tpu.memory_space<any>>
      %c1_i32_19 = arith.constant 1 : i32
      %c0_i32_20 = arith.constant 0 : i32
      %47 = tpu.memref_slice %arg9[%c1_i32_19, %c0_i32_20] : memref<8x128xf32, #tpu.memory_space<vmem>> -> memref<1x128xf32, #tpu.memory_space<vmem>>
      %48 = tpu.memref_slice %arg12[%c1_i32] : memref<8x!tpu.dma_semaphore, #tpu.memory_space<semaphore_mem>> -> memref<1x!tpu.dma_semaphore, #tpu.memory_space<semaphore_mem>>
      %49 = tpu.memref_squeeze %48 : memref<1x!tpu.dma_semaphore, #tpu.memory_space<semaphore_mem>> -> memref<!tpu.dma_semaphore, #tpu.memory_space<semaphore_mem>>
      tpu.enqueue_dma source(%46 : memref<1x128xf32, #tpu.memory_space<any>>) target(%47 : memref<1x128xf32, #tpu.memory_space<vmem>>) target_semaphore(%49 : memref<!tpu.dma_semaphore, #tpu.memory_space<semaphore_mem>>)
      %c2 = arith.constant 2 : index
      %50 = memref.load %arg1[%c2] : memref<8xi32, #tpu.memory_space<smem>>
      %c2_i32 = arith.constant 2 : i32
      %c0_i32_21 = arith.constant 0 : i32
      %51 = tpu.memref_slice %arg2[%50, %c0_i32_21] : memref<64x128xf32, #tpu.memory_space<any>> -> memref<1x128xf32, #tpu.memory_space<any>>
      %c2_i32_22 = arith.constant 2 : i32
      %c0_i32_23 = arith.constant 0 : i32
      %52 = tpu.memref_slice %arg9[%c2_i32_22, %c0_i32_23] : memref<8x128xf32, #tpu.memory_space<vmem>> -> memref<1x128xf32, #tpu.memory_space<vmem>>
      %53 = tpu.memref_slice %arg12[%c2_i32] : memref<8x!tpu.dma_semaphore, #tpu.memory_space<semaphore_mem>> -> memref<1x!tpu.dma_semaphore, #tpu.memory_space<semaphore_mem>>
      %54 = tpu.memref_squeeze %53 : memref<1x!tpu.dma_semaphore, #tpu.memory_space<semaphore_mem>> -> memref<!tpu.dma_semaphore, #tpu.memory_space<semaphore_mem>>
      tpu.enqueue_dma source(%51 : memref<1x128xf32, #tpu.memory_space<any>>) target(%52 : memref<1x128xf32, #tpu.memory_space<vmem>>) target_semaphore(%54 : memref<!tpu.dma_semaphore, #tpu.memory_space<semaphore_mem>>)
      %c3 = arith.constant 3 : index
      %55 = memref.load %arg1[%c3] : memref<8xi32, #tpu.memory_space<smem>>
      %c3_i32 = arith.constant 3 : i32
      %c0_i32_24 = arith.constant 0 : i32
      %56 = tpu.memref_slice %arg2[%55, %c0_i32_24] : memref<64x128xf32, #tpu.memory_space<any>> -> memref<1x128xf32, #tpu.memory_space<any>>
      %c3_i32_25 = arith.constant 3 : i32
      %c0_i32_26 = arith.constant 0 : i32
      %57 = tpu.memref_slice %arg9[%c3_i32_25, %c0_i32_26] : memref<8x128xf32, #tpu.memory_space<vmem>> -> memref<1x128xf32, #tpu.memory_space<vmem>>
      %58 = tpu.memref_slice %arg12[%c3_i32] : memref<8x!tpu.dma_semaphore, #tpu.memory_space<semaphore_mem>> -> memref<1x!tpu.dma_semaphore, #tpu.memory_space<semaphore_mem>>
      %59 = tpu.memref_squeeze %58 : memref<1x!tpu.dma_semaphore, #tpu.memory_space<semaphore_mem>> -> memref<!tpu.dma_semaphore, #tpu.memory_space<semaphore_mem>>
      tpu.enqueue_dma source(%56 : memref<1x128xf32, #tpu.memory_space<any>>) target(%57 : memref<1x128xf32, #tpu.memory_space<vmem>>) target_semaphore(%59 : memref<!tpu.dma_semaphore, #tpu.memory_space<semaphore_mem>>)
      %c4 = arith.constant 4 : index
      %60 = memref.load %arg1[%c4] : memref<8xi32, #tpu.memory_space<smem>>
      %c4_i32 = arith.constant 4 : i32
      %c0_i32_27 = arith.constant 0 : i32
      %61 = tpu.memref_slice %arg2[%60, %c0_i32_27] : memref<64x128xf32, #tpu.memory_space<any>> -> memref<1x128xf32, #tpu.memory_space<any>>
      %c4_i32_28 = arith.constant 4 : i32
      %c0_i32_29 = arith.constant 0 : i32
      %62 = tpu.memref_slice %arg9[%c4_i32_28, %c0_i32_29] : memref<8x128xf32, #tpu.memory_space<vmem>> -> memref<1x128xf32, #tpu.memory_space<vmem>>
      %63 = tpu.memref_slice %arg12[%c4_i32] : memref<8x!tpu.dma_semaphore, #tpu.memory_space<semaphore_mem>> -> memref<1x!tpu.dma_semaphore, #tpu.memory_space<semaphore_mem>>
      %64 = tpu.memref_squeeze %63 : memref<1x!tpu.dma_semaphore, #tpu.memory_space<semaphore_mem>> -> memref<!tpu.dma_semaphore, #tpu.memory_space<semaphore_mem>>
      tpu.enqueue_dma source(%61 : memref<1x128xf32, #tpu.memory_space<any>>) target(%62 : memref<1x128xf32, #tpu.memory_space<vmem>>) target_semaphore(%64 : memref<!tpu.dma_semaphore, #tpu.memory_space<semaphore_mem>>)
      %c5 = arith.constant 5 : index
      %65 = memref.load %arg1[%c5] : memref<8xi32, #tpu.memory_space<smem>>
      %c5_i32 = arith.constant 5 : i32
      %c0_i32_30 = arith.constant 0 : i32
      %66 = tpu.memref_slice %arg2[%65, %c0_i32_30] : memref<64x128xf32, #tpu.memory_space<any>> -> memref<1x128xf32, #tpu.memory_space<any>>
      %c5_i32_31 = arith.constant 5 : i32
      %c0_i32_32 = arith.constant 0 : i32
      %67 = tpu.memref_slice %arg9[%c5_i32_31, %c0_i32_32] : memref<8x128xf32, #tpu.memory_space<vmem>> -> memref<1x128xf32, #tpu.memory_space<vmem>>
      %68 = tpu.memref_slice %arg12[%c5_i32] : memref<8x!tpu.dma_semaphore, #tpu.memory_space<semaphore_mem>> -> memref<1x!tpu.dma_semaphore, #tpu.memory_space<semaphore_mem>>
      %69 = tpu.memref_squeeze %68 : memref<1x!tpu.dma_semaphore, #tpu.memory_space<semaphore_mem>> -> memref<!tpu.dma_semaphore, #tpu.memory_space<semaphore_mem>>
      tpu.enqueue_dma source(%66 : memref<1x128xf32, #tpu.memory_space<any>>) target(%67 : memref<1x128xf32, #tpu.memory_space<vmem>>) target_semaphore(%69 : memref<!tpu.dma_semaphore, #tpu.memory_space<semaphore_mem>>)
      %c6 = arith.constant 6 : index
      %70 = memref.load %arg1[%c6] : memref<8xi32, #tpu.memory_space<smem>>
      %c6_i32 = arith.constant 6 : i32
      %c0_i32_33 = arith.constant 0 : i32
      %71 = tpu.memref_slice %arg2[%70, %c0_i32_33] : memref<64x128xf32, #tpu.memory_space<any>> -> memref<1x128xf32, #tpu.memory_space<any>>
      %c6_i32_34 = arith.constant 6 : i32
      %c0_i32_35 = arith.constant 0 : i32
      %72 = tpu.memref_slice %arg9[%c6_i32_34, %c0_i32_35] : memref<8x128xf32, #tpu.memory_space<vmem>> -> memref<1x128xf32, #tpu.memory_space<vmem>>
      %73 = tpu.memref_slice %arg12[%c6_i32] : memref<8x!tpu.dma_semaphore, #tpu.memory_space<semaphore_mem>> -> memref<1x!tpu.dma_semaphore, #tpu.memory_space<semaphore_mem>>
      %74 = tpu.memref_squeeze %73 : memref<1x!tpu.dma_semaphore, #tpu.memory_space<semaphore_mem>> -> memref<!tpu.dma_semaphore, #tpu.memory_space<semaphore_mem>>
      tpu.enqueue_dma source(%71 : memref<1x128xf32, #tpu.memory_space<any>>) target(%72 : memref<1x128xf32, #tpu.memory_space<vmem>>) target_semaphore(%74 : memref<!tpu.dma_semaphore, #tpu.memory_space<semaphore_mem>>)
      %c7 = arith.constant 7 : index
      %75 = memref.load %arg1[%c7] : memref<8xi32, #tpu.memory_space<smem>>
      %c7_i32 = arith.constant 7 : i32
      %c0_i32_36 = arith.constant 0 : i32
      %76 = tpu.memref_slice %arg2[%75, %c0_i32_36] : memref<64x128xf32, #tpu.memory_space<any>> -> memref<1x128xf32, #tpu.memory_space<any>>
      %c7_i32_37 = arith.constant 7 : i32
      %c0_i32_38 = arith.constant 0 : i32
      %77 = tpu.memref_slice %arg9[%c7_i32_37, %c0_i32_38] : memref<8x128xf32, #tpu.memory_space<vmem>> -> memref<1x128xf32, #tpu.memory_space<vmem>>
      %78 = tpu.memref_slice %arg12[%c7_i32] : memref<8x!tpu.dma_semaphore, #tpu.memory_space<semaphore_mem>> -> memref<1x!tpu.dma_semaphore, #tpu.memory_space<semaphore_mem>>
      %79 = tpu.memref_squeeze %78 : memref<1x!tpu.dma_semaphore, #tpu.memory_space<semaphore_mem>> -> memref<!tpu.dma_semaphore, #tpu.memory_space<semaphore_mem>>
      tpu.enqueue_dma source(%76 : memref<1x128xf32, #tpu.memory_space<any>>) target(%77 : memref<1x128xf32, #tpu.memory_space<vmem>>) target_semaphore(%79 : memref<!tpu.dma_semaphore, #tpu.memory_space<semaphore_mem>>)
      %c0_i32_39 = arith.constant 0 : i32
      %c0_i32_40 = arith.constant 0 : i32
      %80 = tpu.memref_slice %arg2[%40, %c0_i32_40] : memref<64x128xf32, #tpu.memory_space<any>> -> memref<1x128xf32, #tpu.memory_space<any>>
      %c0_i32_41 = arith.constant 0 : i32
      %c0_i32_42 = arith.constant 0 : i32
      %81 = tpu.memref_slice %arg9[%c0_i32_41, %c0_i32_42] : memref<8x128xf32, #tpu.memory_space<vmem>> -> memref<1x128xf32, #tpu.memory_space<vmem>>
      %82 = tpu.memref_slice %arg12[%c0_i32_39] : memref<8x!tpu.dma_semaphore, #tpu.memory_space<semaphore_mem>> -> memref<1x!tpu.dma_semaphore, #tpu.memory_space<semaphore_mem>>
      %83 = tpu.memref_squeeze %82 : memref<1x!tpu.dma_semaphore, #tpu.memory_space<semaphore_mem>> -> memref<!tpu.dma_semaphore, #tpu.memory_space<semaphore_mem>>
      tpu.wait_dma2 semaphore(%83 : memref<!tpu.dma_semaphore, #tpu.memory_space<semaphore_mem>>) src(%80 : memref<1x128xf32, #tpu.memory_space<any>>) dst(%81 : memref<1x128xf32, #tpu.memory_space<vmem>>)
      %c1_i32_43 = arith.constant 1 : i32
      %c0_i32_44 = arith.constant 0 : i32
      %84 = tpu.memref_slice %arg2[%45, %c0_i32_44] : memref<64x128xf32, #tpu.memory_space<any>> -> memref<1x128xf32, #tpu.memory_space<any>>
      %c1_i32_45 = arith.constant 1 : i32
      %c0_i32_46 = arith.constant 0 : i32
      %85 = tpu.memref_slice %arg9[%c1_i32_45, %c0_i32_46] : memref<8x128xf32, #tpu.memory_space<vmem>> -> memref<1x128xf32, #tpu.memory_space<vmem>>
      %86 = tpu.memref_slice %arg12[%c1_i32_43] : memref<8x!tpu.dma_semaphore, #tpu.memory_space<semaphore_mem>> -> memref<1x!tpu.dma_semaphore, #tpu.memory_space<semaphore_mem>>
      %87 = tpu.memref_squeeze %86 : memref<1x!tpu.dma_semaphore, #tpu.memory_space<semaphore_mem>> -> memref<!tpu.dma_semaphore, #tpu.memory_space<semaphore_mem>>
      tpu.wait_dma2 semaphore(%87 : memref<!tpu.dma_semaphore, #tpu.memory_space<semaphore_mem>>) src(%84 : memref<1x128xf32, #tpu.memory_space<any>>) dst(%85 : memref<1x128xf32, #tpu.memory_space<vmem>>)
      %c2_i32_47 = arith.constant 2 : i32
      %c0_i32_48 = arith.constant 0 : i32
      %88 = tpu.memref_slice %arg2[%50, %c0_i32_48] : memref<64x128xf32, #tpu.memory_space<any>> -> memref<1x128xf32, #tpu.memory_space<any>>
      %c2_i32_49 = arith.constant 2 : i32
      %c0_i32_50 = arith.constant 0 : i32
      %89 = tpu.memref_slice %arg9[%c2_i32_49, %c0_i32_50] : memref<8x128xf32, #tpu.memory_space<vmem>> -> memref<1x128xf32, #tpu.memory_space<vmem>>
      %90 = tpu.memref_slice %arg12[%c2_i32_47] : memref<8x!tpu.dma_semaphore, #tpu.memory_space<semaphore_mem>> -> memref<1x!tpu.dma_semaphore, #tpu.memory_space<semaphore_mem>>
      %91 = tpu.memref_squeeze %90 : memref<1x!tpu.dma_semaphore, #tpu.memory_space<semaphore_mem>> -> memref<!tpu.dma_semaphore, #tpu.memory_space<semaphore_mem>>
      tpu.wait_dma2 semaphore(%91 : memref<!tpu.dma_semaphore, #tpu.memory_space<semaphore_mem>>) src(%88 : memref<1x128xf32, #tpu.memory_space<any>>) dst(%89 : memref<1x128xf32, #tpu.memory_space<vmem>>)
      %c3_i32_51 = arith.constant 3 : i32
      %c0_i32_52 = arith.constant 0 : i32
      %92 = tpu.memref_slice %arg2[%55, %c0_i32_52] : memref<64x128xf32, #tpu.memory_space<any>> -> memref<1x128xf32, #tpu.memory_space<any>>
      %c3_i32_53 = arith.constant 3 : i32
      %c0_i32_54 = arith.constant 0 : i32
      %93 = tpu.memref_slice %arg9[%c3_i32_53, %c0_i32_54] : memref<8x128xf32, #tpu.memory_space<vmem>> -> memref<1x128xf32, #tpu.memory_space<vmem>>
      %94 = tpu.memref_slice %arg12[%c3_i32_51] : memref<8x!tpu.dma_semaphore, #tpu.memory_space<semaphore_mem>> -> memref<1x!tpu.dma_semaphore, #tpu.memory_space<semaphore_mem>>
      %95 = tpu.memref_squeeze %94 : memref<1x!tpu.dma_semaphore, #tpu.memory_space<semaphore_mem>> -> memref<!tpu.dma_semaphore, #tpu.memory_space<semaphore_mem>>
      tpu.wait_dma2 semaphore(%95 : memref<!tpu.dma_semaphore, #tpu.memory_space<semaphore_mem>>) src(%92 : memref<1x128xf32, #tpu.memory_space<any>>) dst(%93 : memref<1x128xf32, #tpu.memory_space<vmem>>)
      %c4_i32_55 = arith.constant 4 : i32
      %c0_i32_56 = arith.constant 0 : i32
      %96 = tpu.memref_slice %arg2[%60, %c0_i32_56] : memref<64x128xf32, #tpu.memory_space<any>> -> memref<1x128xf32, #tpu.memory_space<any>>
      %c4_i32_57 = arith.constant 4 : i32
      %c0_i32_58 = arith.constant 0 : i32
      %97 = tpu.memref_slice %arg9[%c4_i32_57, %c0_i32_58] : memref<8x128xf32, #tpu.memory_space<vmem>> -> memref<1x128xf32, #tpu.memory_space<vmem>>
      %98 = tpu.memref_slice %arg12[%c4_i32_55] : memref<8x!tpu.dma_semaphore, #tpu.memory_space<semaphore_mem>> -> memref<1x!tpu.dma_semaphore, #tpu.memory_space<semaphore_mem>>
      %99 = tpu.memref_squeeze %98 : memref<1x!tpu.dma_semaphore, #tpu.memory_space<semaphore_mem>> -> memref<!tpu.dma_semaphore, #tpu.memory_space<semaphore_mem>>
      tpu.wait_dma2 semaphore(%99 : memref<!tpu.dma_semaphore, #tpu.memory_space<semaphore_mem>>) src(%96 : memref<1x128xf32, #tpu.memory_space<any>>) dst(%97 : memref<1x128xf32, #tpu.memory_space<vmem>>)
      %c5_i32_59 = arith.constant 5 : i32
      %c0_i32_60 = arith.constant 0 : i32
      %100 = tpu.memref_slice %arg2[%65, %c0_i32_60] : memref<64x128xf32, #tpu.memory_space<any>> -> memref<1x128xf32, #tpu.memory_space<any>>
      %c5_i32_61 = arith.constant 5 : i32
      %c0_i32_62 = arith.constant 0 : i32
      %101 = tpu.memref_slice %arg9[%c5_i32_61, %c0_i32_62] : memref<8x128xf32, #tpu.memory_space<vmem>> -> memref<1x128xf32, #tpu.memory_space<vmem>>
      %102 = tpu.memref_slice %arg12[%c5_i32_59] : memref<8x!tpu.dma_semaphore, #tpu.memory_space<semaphore_mem>> -> memref<1x!tpu.dma_semaphore, #tpu.memory_space<semaphore_mem>>
      %103 = tpu.memref_squeeze %102 : memref<1x!tpu.dma_semaphore, #tpu.memory_space<semaphore_mem>> -> memref<!tpu.dma_semaphore, #tpu.memory_space<semaphore_mem>>
      tpu.wait_dma2 semaphore(%103 : memref<!tpu.dma_semaphore, #tpu.memory_space<semaphore_mem>>) src(%100 : memref<1x128xf32, #tpu.memory_space<any>>) dst(%101 : memref<1x128xf32, #tpu.memory_space<vmem>>)
      %c6_i32_63 = arith.constant 6 : i32
      %c0_i32_64 = arith.constant 0 : i32
      %104 = tpu.memref_slice %arg2[%70, %c0_i32_64] : memref<64x128xf32, #tpu.memory_space<any>> -> memref<1x128xf32, #tpu.memory_space<any>>
      %c6_i32_65 = arith.constant 6 : i32
      %c0_i32_66 = arith.constant 0 : i32
      %105 = tpu.memref_slice %arg9[%c6_i32_65, %c0_i32_66] : memref<8x128xf32, #tpu.memory_space<vmem>> -> memref<1x128xf32, #tpu.memory_space<vmem>>
      %106 = tpu.memref_slice %arg12[%c6_i32_63] : memref<8x!tpu.dma_semaphore, #tpu.memory_space<semaphore_mem>> -> memref<1x!tpu.dma_semaphore, #tpu.memory_space<semaphore_mem>>
      %107 = tpu.memref_squeeze %106 : memref<1x!tpu.dma_semaphore, #tpu.memory_space<semaphore_mem>> -> memref<!tpu.dma_semaphore, #tpu.memory_space<semaphore_mem>>
      tpu.wait_dma2 semaphore(%107 : memref<!tpu.dma_semaphore, #tpu.memory_space<semaphore_mem>>) src(%104 : memref<1x128xf32, #tpu.memory_space<any>>) dst(%105 : memref<1x128xf32, #tpu.memory_space<vmem>>)
      %c7_i32_67 = arith.constant 7 : i32
      %c0_i32_68 = arith.constant 0 : i32
      %108 = tpu.memref_slice %arg2[%75, %c0_i32_68] : memref<64x128xf32, #tpu.memory_space<any>> -> memref<1x128xf32, #tpu.memory_space<any>>
      %c7_i32_69 = arith.constant 7 : i32
      %c0_i32_70 = arith.constant 0 : i32
      %109 = tpu.memref_slice %arg9[%c7_i32_69, %c0_i32_70] : memref<8x128xf32, #tpu.memory_space<vmem>> -> memref<1x128xf32, #tpu.memory_space<vmem>>
      %110 = tpu.memref_slice %arg12[%c7_i32_67] : memref<8x!tpu.dma_semaphore, #tpu.memory_space<semaphore_mem>> -> memref<1x!tpu.dma_semaphore, #tpu.memory_space<semaphore_mem>>
      %111 = tpu.memref_squeeze %110 : memref<1x!tpu.dma_semaphore, #tpu.memory_space<semaphore_mem>> -> memref<!tpu.dma_semaphore, #tpu.memory_space<semaphore_mem>>
      tpu.wait_dma2 semaphore(%111 : memref<!tpu.dma_semaphore, #tpu.memory_space<semaphore_mem>>) src(%108 : memref<1x128xf32, #tpu.memory_space<any>>) dst(%109 : memref<1x128xf32, #tpu.memory_space<vmem>>)
      %c0_71 = arith.constant 0 : index
      %c0_72 = arith.constant 0 : index
      %112 = vector.load %arg9[%c0_71, %c0_72] : memref<8x128xf32, #tpu.memory_space<vmem>>, vector<8x128xf32>
      %113 = arith.truncf %112 : vector<8x128xf32> to vector<8x128xbf16>
      %c0_73 = arith.constant 0 : index
      %c0_74 = arith.constant 0 : index
      %114 = vector.load %arg3[%c0_73, %c0_74] : memref<128x384xbf16, #tpu.memory_space<vmem>>, vector<128x384xbf16>
      %cst_75 = arith.constant dense<0.000000e+00> : vector<8x384xf32>
      %115 = tpu.matmul %113, %114, %cst_75 {dimension_numbers = #tpu.dot_dimension_numbers<[1], [0], [0], [1], [0, 0, 1, 1], [], []>} : vector<8x128xbf16>, vector<128x384xbf16>, vector<8x384xf32> -> vector<8x384xf32>
      %c0_76 = arith.constant 0 : index
      %c0_77 = arith.constant 0 : index
      %116 = vector.load %arg5[%c0_76, %c0_77] : memref<1x384xf32, #tpu.memory_space<vmem>>, vector<1x384xf32>
      %117 = vector.broadcast %116 : vector<1x384xf32> to vector<8x384xf32>
      %118 = arith.addf %115, %117 : vector<8x384xf32>
      %c0_78 = arith.constant 0 : index
      %c0_79 = arith.constant 0 : index
      %119 = vector.load %arg10[%c0_78, %c0_79] : memref<8x384xf32, #tpu.memory_space<vmem>>, vector<8x384xf32>
      tpu.vector_store %arg10[%c0_78, %c0_79], %118 {strides = array<i32>} : memref<8x384xf32, #tpu.memory_space<vmem>>, vector<8x384xf32>,
      %c0_80 = arith.constant 0 : index
      %c0_81 = arith.constant 0 : index
      %120 = vector.load %arg7[%c0_80, %c0_81] : memref<1x128xf32, #tpu.memory_space<vmem>>, vector<1x128xf32>
      %c0_82 = arith.constant 0 : index
      %c0_83 = arith.constant 0 : index
      %121 = vector.load %arg11[%c0_82, %c0_83] : memref<1x128xf32, #tpu.memory_space<vmem>>, vector<1x128xf32>
      tpu.vector_store %arg11[%c0_82, %c0_83], %120 {strides = array<i32>} : memref<1x128xf32, #tpu.memory_space<vmem>>, vector<1x128xf32>,
    } else {
    }
    %c0 = arith.constant 0 : index
    %c0_1 = arith.constant 0 : index
    %3 = vector.load %arg11[%c0, %c0_1] : memref<1x128xf32, #tpu.memory_space<vmem>>, vector<1x128xf32>
    %4 = arith.truncf %3 : vector<1x128xf32> to vector<1x128xbf16>
    %c0_2 = arith.constant 0 : index
    %c0_3 = arith.constant 0 : index
    %5 = vector.load %arg4[%c0_2, %c0_3] : memref<128x384xbf16, #tpu.memory_space<vmem>>, vector<128x384xbf16>
    %cst = arith.constant dense<0.000000e+00> : vector<1x384xf32>
    %6 = tpu.matmul %4, %5, %cst {dimension_numbers = #tpu.dot_dimension_numbers<[1], [0], [0], [1], [0, 0, 1, 1], [], []>} : vector<1x128xbf16>, vector<128x384xbf16>, vector<1x384xf32> -> vector<1x384xf32>
    %7 = arith.index_cast %arg0 : i32 to index
    %c0_4 = arith.constant 0 : index
    %8 = vector.load %arg10[%7, %c0_4] : memref<8x384xf32, #tpu.memory_space<vmem>>, vector<1x384xf32>
    %9 = vector.extract_strided_slice %8 {offsets = [0, 0], sizes = [1, 128], strides = [1, 1]} : vector<1x384xf32> to vector<1x128xf32>
    %10 = vector.extract_strided_slice %6 {offsets = [0, 0], sizes = [1, 128], strides = [1, 1]} : vector<1x384xf32> to vector<1x128xf32>
    %11 = arith.addf %9, %10 : vector<1x128xf32>
    %12 = arith.negf %11 : vector<1x128xf32>
    %13 = math.exp %12 : vector<1x128xf32>
    %cst_5 = arith.constant 1.000000e+00 : f32
    %14 = vector.broadcast %cst_5 : f32 to vector<1x128xf32>
    %15 = arith.addf %14, %13 : vector<1x128xf32>
    %16 = arith.divf %14, %15 : vector<1x128xf32>
    %17 = vector.extract_strided_slice %8 {offsets = [0, 128], sizes = [1, 128], strides = [1, 1]} : vector<1x384xf32> to vector<1x128xf32>
    %18 = vector.extract_strided_slice %6 {offsets = [0, 128], sizes = [1, 128], strides = [1, 1]} : vector<1x384xf32> to vector<1x128xf32>
    %19 = arith.addf %17, %18 : vector<1x128xf32>
    %20 = arith.negf %19 : vector<1x128xf32>
    %21 = math.exp %20 : vector<1x128xf32>
    %cst_6 = arith.constant 1.000000e+00 : f32
    %22 = vector.broadcast %cst_6 : f32 to vector<1x128xf32>
    %23 = arith.addf %22, %21 : vector<1x128xf32>
    %24 = arith.divf %22, %23 : vector<1x128xf32>
    %25 = vector.extract_strided_slice %8 {offsets = [0, 256], sizes = [1, 128], strides = [1, 1]} : vector<1x384xf32> to vector<1x128xf32>
    %26 = vector.extract_strided_slice %6 {offsets = [0, 256], sizes = [1, 128], strides = [1, 1]} : vector<1x384xf32> to vector<1x128xf32>
    %c0_7 = arith.constant 0 : index
    %c0_8 = arith.constant 0 : index
    %27 = vector.load %arg6[%c0_7, %c0_8] : memref<1x128xf32, #tpu.memory_space<vmem>>, vector<1x128xf32>
    %28 = arith.addf %26, %27 : vector<1x128xf32>
    %29 = arith.mulf %16, %28 : vector<1x128xf32>
    %30 = arith.addf %25, %29 : vector<1x128xf32>
    %31 = math.tanh %30 : vector<1x128xf32>
    %cst_9 = arith.constant 1.000000e+00 : f32
    %32 = vector.broadcast %cst_9 : f32 to vector<1x128xf32>
    %33 = arith.subf %32, %24 : vector<1x128xf32>
    %34 = arith.mulf %33, %31 : vector<1x128xf32>
    %35 = arith.mulf %24, %3 : vector<1x128xf32>
    %36 = arith.addf %34, %35 : vector<1x128xf32>
    %c0_10 = arith.constant 0 : index
    %c0_11 = arith.constant 0 : index
    %37 = vector.load %arg11[%c0_10, %c0_11] : memref<1x128xf32, #tpu.memory_space<vmem>>, vector<1x128xf32>
    tpu.vector_store %arg11[%c0_10, %c0_11], %36 {strides = array<i32>} : memref<1x128xf32, #tpu.memory_space<vmem>>, vector<1x128xf32>,
    %38 = arith.index_cast %arg0 : i32 to index
    %c0_12 = arith.constant 0 : index
    %39 = vector.load %arg8[%38, %c0_12] : memref<8x128xf32, #tpu.memory_space<vmem>>, vector<1x128xf32>
    tpu.vector_store %arg8[%38, %c0_12], %36 {strides = array<i32>} : memref<8x128xf32, #tpu.memory_space<vmem>>, vector<1x128xf32>,
    return
  }
  func.func @transform_1(%arg0: i32, %arg1: memref<8xi32, #tpu.memory_space<smem>>) -> (i32, i32) {
    %c0_i32 = arith.constant 0 : i32
    %c0_i32_0 = arith.constant 0 : i32
    %c0_i32_1 = arith.constant 0 : i32
    return %c0_i32, %c0_i32_0 : i32, i32
  }
  func.func @transform_2(%arg0: i32, %arg1: memref<8xi32, #tpu.memory_space<smem>>) -> (i32, i32) {
    %c0_i32 = arith.constant 0 : i32
    %c0_i32_0 = arith.constant 0 : i32
    %c0_i32_1 = arith.constant 0 : i32
    return %c0_i32, %c0_i32_0 : i32, i32
  }
  func.func @transform_3(%arg0: i32, %arg1: memref<8xi32, #tpu.memory_space<smem>>) -> (i32, i32) {
    %c0_i32 = arith.constant 0 : i32
    %c0_i32_0 = arith.constant 0 : i32
    %c0_i32_1 = arith.constant 0 : i32
    return %c0_i32, %c0_i32_0 : i32, i32
  }
  func.func @transform_4(%arg0: i32, %arg1: memref<8xi32, #tpu.memory_space<smem>>) -> (i32, i32) {
    %c0_i32 = arith.constant 0 : i32
    %c0_i32_0 = arith.constant 0 : i32
    %c0_i32_1 = arith.constant 0 : i32
    return %c0_i32, %c0_i32_0 : i32, i32
  }
  func.func @transform_5(%arg0: i32, %arg1: memref<8xi32, #tpu.memory_space<smem>>) -> (i32, i32) {
    %c0_i32 = arith.constant 0 : i32
    %c0_i32_0 = arith.constant 0 : i32
    %c0_i32_1 = arith.constant 0 : i32
    return %c0_i32, %c0_i32_0 : i32, i32
  }
  func.func @transform_6(%arg0: i32, %arg1: memref<8xi32, #tpu.memory_space<smem>>) -> (i32, i32) {
    %c0_i32 = arith.constant 0 : i32
    %c0_i32_0 = arith.constant 0 : i32
    %c0_i32_1 = arith.constant 0 : i32
    return %c0_i32, %c0_i32_0 : i32, i32
  }
}

</mosaic_0001>

<llo_original>
// kernel: tpu_custom_call.1
$region0: #{tpu_custom_call.1}
  #allocation0 [shape = 'u32[]', space=smem, size = 0x4, offset = 0x4, fixed_abs, tag = 'smem constant byte address 0x4 - core index']
  #allocation1 [shape = 'u32[144,128]{1,0:T(1,128)}', space=vmem, size = 0x12000, scoped, tag = 'internal scratch']
  #allocation2 [shape = 'f32[8,128]{1,0:T(8,128)}', space=vmem, size = 0x1000, scoped, tag = 'scratch operand']
  #allocation3 [shape = 'f32[8,384]{1,0:T(8,128)}', space=vmem, size = 0x3000, scoped, tag = 'scratch operand']
  #allocation4 [shape = 'f32[1,128]{1,0:T(1,128)}', space=vmem, size = 0x200, scoped, tag = 'scratch operand']
  #allocation5 [shape = 's32[8]{0}', space=sflag, size = 0x20, scoped, tag = 'scratch operand']
  #allocation6 [shape = 's32[1]{0}', space=sflag, size = 0x4, scoped, tag = 'scoped memory for tpu_custom_call.1']
  #allocation7 [shape = 'u8[512]{0}', space=smem, size = 0x200, scoped, tag = 'prefetched SMEM operand 0']
  #allocation14 [shape = 's32[]', space=sflag, size = 0x4, offset = 0, fixed_abs, tag = 'sflag constant byte address 0x0 - dummy sync flag']
  #allocation15 [shape = 's32[]', space=sflag, size = 0x4, offset = 0, fixed_abs, tag = 'sflag constant byte address 0x0 - dummy sync flag']
  #allocation16 [shape = 'u32[]', space=smem, size = 0x4, offset = 0x44, fixed_abs, tag = 'smem constant byte address 0x44 - assertion arg 0']
  #allocation17 [shape = 'u32[]', space=smem, size = 0x4, offset = 0x48, fixed_abs, tag = 'smem constant byte address 0x48 - assertion arg 1']
  #allocation18 [shape = 's32[]', space=sflag, size = 0x4, offset = 0, fixed_abs, tag = 'sflag constant byte address 0x0 - dummy sync flag']
  #allocation19 [shape = 's32[]', space=sflag, size = 0x4, offset = 0, fixed_abs, tag = 'sflag constant byte address 0x0 - dummy sync flag']
  #allocation20 [shape = 's32[]', space=sflag, size = 0x4, offset = 0, fixed_abs, tag = 'sflag constant byte address 0x0 - dummy sync flag']
  #allocation21 [shape = 's32[]', space=sflag, size = 0x4, offset = 0, fixed_abs, tag = 'sflag constant byte address 0x0 - dummy sync flag']
  #allocation22 [shape = 's32[]', space=sflag, size = 0x4, offset = 0, fixed_abs, tag = 'sflag constant byte address 0x0 - dummy sync flag']
  #allocation23 [shape = 's32[]', space=sflag, size = 0x4, offset = 0, fixed_abs, tag = 'sflag constant byte address 0x0 - dummy sync flag']
  #allocation24 [shape = 's32[]', space=sflag, size = 0x4, offset = 0, fixed_abs, tag = 'sflag constant byte address 0x0 - dummy sync flag']
  #allocation25 [shape = 's32[]', space=sflag, size = 0x4, offset = 0, fixed_abs, tag = 'sflag constant byte address 0x0 - dummy sync flag']
  #allocation26 [shape = 's32[]', space=sflag, size = 0x4, offset = 0, fixed_abs, tag = 'sflag constant byte address 0x0 - dummy sync flag']
  #allocation27 [shape = 's32[]', space=sflag, size = 0x4, offset = 0, fixed_abs, tag = 'sflag constant byte address 0x0 - dummy sync flag']
  #allocation28 [shape = 's32[]', space=sflag, size = 0x4, offset = 0, fixed_abs, tag = 'sflag constant byte address 0x0 - dummy sync flag']
  #allocation29 [shape = 's32[]', space=sflag, size = 0x4, offset = 0, fixed_abs, tag = 'sflag constant byte address 0x0 - dummy sync flag']
  #allocation30 [shape = 's32[]', space=sflag, size = 0x4, offset = 0, fixed_abs, tag = 'sflag constant byte address 0x0 - dummy sync flag']
  #allocation31 [shape = 's32[]', space=sflag, size = 0x4, offset = 0, fixed_abs, tag = 'sflag constant byte address 0x0 - dummy sync flag']
  %s0 = inlined_call_operand.hbm [shape: s32[8], index: 0, kind: input, shape index: {}]
  %s1 = inlined_call_operand.hbm [shape: f32[64,128], index: 1, kind: input, shape index: {}]
  %s2 = inlined_call_operand.hbm [shape: bf16[128,384], index: 2, kind: input, shape index: {}]
  %s3 = inlined_call_operand.hbm [shape: bf16[128,384], index: 3, kind: input, shape index: {}]
  %s4 = inlined_call_operand.vmem [shape: f32[1,384], index: 4, kind: input, shape index: {}]
  %s5 = inlined_call_operand.vmem [shape: f32[1,128], index: 5, kind: input, shape index: {}]
  %s6 = inlined_call_operand.vmem [shape: f32[1,128], index: 6, kind: input, shape index: {}]
  %s7 = inlined_call_operand.hbm [shape: f32[8,128], index: 7, kind: output, shape index: {}]
  %s8 = sld [smem:[#allocation0]]
  $region97: #{tpu_custom_call.1} parent=0
    _
  %s10 = ssub.s32 1, %s8
  %s11 = scalar_select 0, %s10, %s8
  %13 = dma.hbm_to_smem %s0, 16, [#allocation7], [#allocation6]
  %14 = dma.done [#allocation6], 16
  %15 = sfence
  $region1: #{tpu_custom_call.1} parent=0
    #allocation8 [shape = 'u8[98304]{0}', space=vmem, size = 0x18000, scoped, tag = 'input window, operand 2, single buffered']
    #allocation9 [shape = 's32[2]{0}', space=sflag, size = 0x8, scoped, tag = 'scoped memory for tpu_custom_call.1']
    #allocation10 [shape = 's32[2]{0}', space=sflag, size = 0x8, scoped, tag = 'scoped memory for tpu_custom_call.1']
    #allocation11 [shape = 'u8[98304]{0}', space=vmem, size = 0x18000, scoped, tag = 'input window, operand 3, single buffered']
    #allocation12 [shape = 's32[1]{0}', space=sflag, size = 0x4, scoped, tag = 'scoped memory for tpu_custom_call.1']
    #allocation13 [shape = 'u8[4096]{0}', space=vmem, size = 0x1000, scoped, tag = 'output window, operand 0, single buffered']
    %16 = vsyncpa [#allocation9], 0
    %17 = vsyncpa [#allocation12], 0
    %18 = vsyncpa [#allocation10], 0
    loop: start=0, step=1, limit=10
    $region2: #{tpu_custom_call.1} parent=1 // loop_pre_header
      _
    $region3: #{tpu_custom_call.1} parent=1 // loop_header
      %s20 = sphi 0, %s24
      %p21 = scmp.ge.s32.totalorder %s20, 10
      %s28 = sphi 0, %s28
      %s30 = sphi 0, %s28
      %s31 = sphi 0, %s30
      %s45 = sphi 0, %s31
      %s49 = sphi 0, %s49
      %s51 = sphi 0, %s49
      %s52 = sphi 0, %s51
      %s66 = sphi 0, %s52
      %s70 = sphi 0, %s70
      %s72 = sphi 0, %s70
      %s73 = sphi 0, %s72
      %s87 = sphi 0, %s73
      %s91 = sphi 0, %s91
      %s93 = sphi 0, %s91
      %s94 = sphi 0, %s93
      %s108 = sphi 0, %s94
      %s112 = sphi 0, %s112
      %s114 = sphi 0, %s112
      %s115 = sphi 0, %s114
      %s129 = sphi 0, %s115
      %s133 = sphi 0, %s133
      %s135 = sphi 0, %s133
      %s136 = sphi 0, %s135
      %s150 = sphi 0, %s136
    $region4: #{tpu_custom_call.1} parent=1 // loop_header_branch
      %23 = sbr.rel (%p21) target = $region8
    $region5: #{tpu_custom_call.1} parent=1 // loop_body
      %s25 = ssub.s32 %s20, 1
      %s26 = ssub.s32 %s20, 2
      %s27 = sadd.s32 %s20, 1
      %s29 = sadd.s32 %s28, 1
      %p32 = scmp.eq.s32.totalorder %s20, 7
      %p33 = scmp.ne.s32.totalorder %s28, %s30
      %p34 = scmp.eq.s32.totalorder %s20, 0
      %p35 = por %p33, %p34
      %p36 = scmp.ne.s32.totalorder %s28, %s30
      %p37 = scmp.eq.s32.totalorder %s25, 7
      %p38 = por %p36, %p37
      %p39 = scmp.ne.s32.totalorder %s30, %s31
      %p40 = scmp.eq.s32.totalorder %s25, 0
      %p41 = por %p39, %p40
      %p42 = scmp.ne.s32.totalorder %s30, %s31
      %p43 = scmp.eq.s32.totalorder %s26, 7
      %p44 = por %p42, %p43
      %p46 = scmp.ne.s32.totalorder %s31, %s45
      %p47 = scmp.eq.s32.totalorder %s26, 0
      %p48 = por %p46, %p47
      %s50 = sadd.s32 %s49, 1
      %p53 = scmp.eq.s32.totalorder %s20, 7
      %p54 = scmp.ne.s32.totalorder %s49, %s51
      %p55 = scmp.eq.s32.totalorder %s20, 0
      %p56 = por %p54, %p55
      %p57 = scmp.ne.s32.totalorder %s49, %s51
      %p58 = scmp.eq.s32.totalorder %s25, 7
      %p59 = por %p57, %p58
      %p60 = scmp.ne.s32.totalorder %s51, %s52
      %p61 = scmp.eq.s32.totalorder %s25, 0
      %p62 = por %p60, %p61
      %p63 = scmp.ne.s32.totalorder %s51, %s52
      %p64 = scmp.eq.s32.totalorder %s26, 7
      %p65 = por %p63, %p64
      %p67 = scmp.ne.s32.totalorder %s52, %s66
      %p68 = scmp.eq.s32.totalorder %s26, 0
      %p69 = por %p67, %p68
      %s71 = sadd.s32 %s70, 1
      %p74 = scmp.eq.s32.totalorder %s20, 7
      %p75 = scmp.ne.s32.totalorder %s70, %s72
      %p76 = scmp.eq.s32.totalorder %s20, 0
      %p77 = por %p75, %p76
      %p78 = scmp.ne.s32.totalorder %s70, %s72
      %p79 = scmp.eq.s32.totalorder %s25, 7
      %p80 = por %p78, %p79
      %p81 = scmp.ne.s32.totalorder %s72, %s73
      %p82 = scmp.eq.s32.totalorder %s25, 0
      %p83 = por %p81, %p82
      %p84 = scmp.ne.s32.totalorder %s72, %s73
      %p85 = scmp.eq.s32.totalorder %s26, 7
      %p86 = por %p84, %p85
      %p88 = scmp.ne.s32.totalorder %s73, %s87
      %p89 = scmp.eq.s32.totalorder %s26, 0
      %p90 = por %p88, %p89
      %s92 = sadd.s32 %s91, 1
      %p95 = scmp.eq.s32.totalorder %s20, 7
      %p96 = scmp.ne.s32.totalorder %s91, %s93
      %p97 = scmp.eq.s32.totalorder %s20, 0
      %p98 = por %p96, %p97
      %p99 = scmp.ne.s32.totalorder %s91, %s93
      %p100 = scmp.eq.s32.totalorder %s25, 7
      %p101 = por %p99, %p100
      %p102 = scmp.ne.s32.totalorder %s93, %s94
      %p103 = scmp.eq.s32.totalorder %s25, 0
      %p104 = por %p102, %p103
      %p105 = scmp.ne.s32.totalorder %s93, %s94
      %p106 = scmp.eq.s32.totalorder %s26, 7
      %p107 = por %p105, %p106
      %p109 = scmp.ne.s32.totalorder %s94, %s108
      %p110 = scmp.eq.s32.totalorder %s26, 0
      %p111 = por %p109, %p110
      %s113 = sadd.s32 %s112, 1
      %p116 = scmp.eq.s32.totalorder %s20, 7
      %p117 = scmp.ne.s32.totalorder %s112, %s114
      %p118 = scmp.eq.s32.totalorder %s20, 0
      %p119 = por %p117, %p118
      %p120 = scmp.ne.s32.totalorder %s112, %s114
      %p121 = scmp.eq.s32.totalorder %s25, 7
      %p122 = por %p120, %p121
      %p123 = scmp.ne.s32.totalorder %s114, %s115
      %p124 = scmp.eq.s32.totalorder %s25, 0
      %p125 = por %p123, %p124
      %p126 = scmp.ne.s32.totalorder %s114, %s115
      %p127 = scmp.eq.s32.totalorder %s26, 7
      %p128 = por %p126, %p127
      %p130 = scmp.ne.s32.totalorder %s115, %s129
      %p131 = scmp.eq.s32.totalorder %s26, 0
      %p132 = por %p130, %p131
      %s134 = sadd.s32 %s133, 1
      %p137 = scmp.eq.s32.totalorder %s20, 7
      %p138 = scmp.ne.s32.totalorder %s133, %s135
      %p139 = scmp.eq.s32.totalorder %s20, 0
      %p140 = por %p138, %p139
      %p141 = scmp.ne.s32.totalorder %s133, %s135
      %p142 = scmp.eq.s32.totalorder %s25, 7
      %p143 = por %p141, %p142
      %p144 = scmp.ne.s32.totalorder %s135, %s136
      %p145 = scmp.eq.s32.totalorder %s25, 0
      %p146 = por %p144, %p145
      %p147 = scmp.ne.s32.totalorder %s135, %s136
      %p148 = scmp.eq.s32.totalorder %s26, 7
      %p149 = por %p147, %p148
      %p151 = scmp.ne.s32.totalorder %s136, %s150
      %p152 = scmp.eq.s32.totalorder %s26, 0
      %p153 = por %p151, %p152
      %p154 = scmp.le.s32.totalorder 1, %s20
      %p155 = scmp.lt.s32.totalorder %s20, 9
      %p156 = pnand %p154, %p155
      %p157 = pneg %p156
      // Predicated region
      $region9: #{tpu_custom_call.1} parent=5 // pred_check
        _
      $region10: #{tpu_custom_call.1} parent=5 // pred_check_branch
        %159 = sbr.rel (%p156) target = $region12
      $region11: #{tpu_custom_call.1} parent=5 // pred_region
        %s160 = ssub.s32 %s20, 1
        // Predicated region
        $region13: #{tpu_custom_call.1} parent=11 // pred_check
          %p161 = pneg %p41
        $region14: #{tpu_custom_call.1} parent=11 // pred_check_branch
          %163 = sbr.rel (%p161) target = $region16
        $region15: #{tpu_custom_call.1} parent=11 // pred_region
          %s165 = ssub.s32 3072, 3072
          %166 = vsyncadd [#allocation9], %s165
          %s167 = sshll.u32 [#allocation8], 4
          %s168 = int_to_ptr.vmem [resolvable:$true] %s167
          %173 = dma.hbm_to_vmem [thread:$0]  %s2, 3072, %s168, [#allocation9], 192, 192, 12
        $region16: #{tpu_custom_call.1} parent=11 // pred_fallthru
          _
        // Predicated region
        $region17: #{tpu_custom_call.1} parent=11 // pred_check
          %p174 = pneg %p62
        $region18: #{tpu_custom_call.1} parent=11 // pred_check_branch
          %176 = sbr.rel (%p174) target = $region20
        $region19: #{tpu_custom_call.1} parent=11 // pred_region
          %s178 = ssub.s32 3072, 3072
          %179 = vsyncadd [#allocation12], %s178
          %s180 = sshll.u32 [#allocation11], 4
          %s181 = int_to_ptr.vmem [resolvable:$true] %s180
          %186 = dma.hbm_to_vmem [thread:$0]  %s3, 3072, %s181, [#allocation12], 192, 192, 12
        $region20: #{tpu_custom_call.1} parent=11 // pred_fallthru
          _
        // Predicated region
        $region21: #{tpu_custom_call.1} parent=11 // pred_check
          %p187 = pneg %p83
        $region22: #{tpu_custom_call.1} parent=11 // pred_check_branch
          %189 = sbr.rel (%p187) target = $region24
        $region23: #{tpu_custom_call.1} parent=11 // pred_region
          _
        $region24: #{tpu_custom_call.1} parent=11 // pred_fallthru
          _
        // Predicated region
        $region25: #{tpu_custom_call.1} parent=11 // pred_check
          %p190 = pneg %p104
        $region26: #{tpu_custom_call.1} parent=11 // pred_check_branch
          %192 = sbr.rel (%p190) target = $region28
        $region27: #{tpu_custom_call.1} parent=11 // pred_region
          _
        $region28: #{tpu_custom_call.1} parent=11 // pred_fallthru
          _
        // Predicated region
        $region29: #{tpu_custom_call.1} parent=11 // pred_check
          %p193 = pneg %p125
        $region30: #{tpu_custom_call.1} parent=11 // pred_check_branch
          %195 = sbr.rel (%p193) target = $region32
        $region31: #{tpu_custom_call.1} parent=11 // pred_region
          _
        $region32: #{tpu_custom_call.1} parent=11 // pred_fallthru
          _
      $region12: #{tpu_custom_call.1} parent=5 // pred_fallthru
        _
      %p196 = scmp.lt.s32.totalorder %s20, 8
      // Predicated region
      $region33: #{tpu_custom_call.1} parent=5 // pred_check
        %p197 = pneg %p196
      $region34: #{tpu_custom_call.1} parent=5 // pred_check_branch
        %199 = sbr.rel (%p197) target = $region36
      $region35: #{tpu_custom_call.1} parent=5 // pred_region
        _
      $region36: #{tpu_custom_call.1} parent=5 // pred_fallthru
        _
      %p200 = scmp.le.s32.totalorder 1, %s20
      %p201 = scmp.lt.s32.totalorder %s20, 9
      %p202 = pnand %p200, %p201
      %p203 = pneg %p202
      // Predicated region
      $region37: #{tpu_custom_call.1} parent=5 // pred_check
        _
      $region38: #{tpu_custom_call.1} parent=5 // pred_check_branch
        %205 = sbr.rel (%p202) target = $region40
      $region39: #{tpu_custom_call.1} parent=5 // pred_region
        %s206 = ssub.s32 %s20, 1
        // Predicated region
        $region41: #{tpu_custom_call.1} parent=39 // pred_check
          %p207 = pneg %p41
        $region42: #{tpu_custom_call.1} parent=39 // pred_check_branch
          %209 = sbr.rel (%p207) target = $region44
        $region43: #{tpu_custom_call.1} parent=39 // pred_region
          %210 = dma.done [#allocation9], 3072
        $region44: #{tpu_custom_call.1} parent=39 // pred_fallthru
          _
        // Predicated region
        $region45: #{tpu_custom_call.1} parent=39 // pred_check
          %p211 = pneg %p62
        $region46: #{tpu_custom_call.1} parent=39 // pred_check_branch
          %213 = sbr.rel (%p211) target = $region48
        $region47: #{tpu_custom_call.1} parent=39 // pred_region
          %214 = dma.done [#allocation12], 3072
        $region48: #{tpu_custom_call.1} parent=39 // pred_fallthru
          _
        %p215 = pneg %p41
        %p216 = pneg %p38
        %p217 = pneg %p62
        %p218 = pneg %p59
        %p219 = pneg %p83
        %p220 = pneg %p80
        %p221 = pneg %p104
        %p222 = pneg %p101
        %p223 = pneg %p125
        %p224 = pneg %p122
        %p225 = pneg %p146
        %p226 = pneg %p143
        %p228 = scmp.eq.s32.totalorder %s25, 0
        // Predicated region
        $region49: #{tpu_custom_call.1} parent=39 // pred_check
          %p229 = pneg %p228
        $region50: #{tpu_custom_call.1} parent=39 // pred_check_branch
          %231 = sbr.rel (%p229) target = $region52
        $region51: #{tpu_custom_call.1} parent=39 // pred_region
          %s232 = sld [smem:[#allocation7]]
          %s233 = smul.addr %s232, 16
          %s234 = scalar_lea.hbm %s1, %s233
          // Predicated region
          $region53: #{tpu_custom_call.1} parent=51 // pred_check
            _
          $region54: #{tpu_custom_call.1} parent=51 // pred_check_branch
            %236 = sbr.rel target = $region56
          $region55: #{tpu_custom_call.1} parent=51 // pred_region
            %237 = sst [smem:[#allocation16]] [#allocation15]
            %238 = sst [smem:[#allocation17]] [#allocation14]
          $region56: #{tpu_custom_call.1} parent=51 // pred_fallthru
            _
          %240 = shalt.err (0)
          %s242 = sshll.u32 [#allocation2], 4
          %s243 = int_to_ptr.vmem [resolvable:$true] %s242
          %245 = dma.hbm_to_vmem [thread:$0]  %s234, 16, %s243, [#allocation5]
          %s246 = sld [smem:[#allocation7 + $0x1]]
          %s247 = smul.addr %s246, 16
          %s248 = scalar_lea.hbm %s1, %s247
          %s249 = scalar_lea.vmem [#allocation2], 1
          %s250 = scalar_lea.sflag [#allocation5], 1
          // Predicated region
          $region57: #{tpu_custom_call.1} parent=51 // pred_check
            _
          $region58: #{tpu_custom_call.1} parent=51 // pred_check_branch
            %252 = sbr.rel target = $region60
          $region59: #{tpu_custom_call.1} parent=51 // pred_region
            %253 = sst [smem:[#allocation16]] [#allocation19]
            %254 = sst [smem:[#allocation17]] [#allocation18]
          $region60: #{tpu_custom_call.1} parent=51 // pred_fallthru
            _
          %256 = shalt.err (0)
          %s258 = sshll.u32 %s249, 4
          %s259 = int_to_ptr.vmem [resolvable:$true] %s258
          %261 = dma.hbm_to_vmem [thread:$0]  %s248, 16, %s259, %s250
          %s262 = sld [smem:[#allocation7 + $0x2]]
          %s263 = smul.addr %s262, 16
          %s264 = scalar_lea.hbm %s1, %s263
          %s265 = scalar_lea.vmem [#allocation2], 2
          %s266 = scalar_lea.sflag [#allocation5], 2
          // Predicated region
          $region61: #{tpu_custom_call.1} parent=51 // pred_check
            _
          $region62: #{tpu_custom_call.1} parent=51 // pred_check_branch
            %268 = sbr.rel target = $region64
          $region63: #{tpu_custom_call.1} parent=51 // pred_region
            %269 = sst [smem:[#allocation16]] [#allocation21]
            %270 = sst [smem:[#allocation17]] [#allocation20]
          $region64: #{tpu_custom_call.1} parent=51 // pred_fallthru
            _
          %272 = shalt.err (0)
          %s274 = sshll.u32 %s265, 4
          %s275 = int_to_ptr.vmem [resolvable:$true] %s274
          %277 = dma.hbm_to_vmem [thread:$0]  %s264, 16, %s275, %s266
          %s278 = sld [smem:[#allocation7 + $0x3]]
          %s279 = smul.addr %s278, 16
          %s280 = scalar_lea.hbm %s1, %s279
          %s281 = scalar_lea.vmem [#allocation2], 3
          %s282 = scalar_lea.sflag [#allocation5], 3
          // Predicated region
          $region65: #{tpu_custom_call.1} parent=51 // pred_check
            _
          $region66: #{tpu_custom_call.1} parent=51 // pred_check_branch
            %284 = sbr.rel target = $region68
          $region67: #{tpu_custom_call.1} parent=51 // pred_region
            %285 = sst [smem:[#allocation16]] [#allocation23]
            %286 = sst [smem:[#allocation17]] [#allocation22]
          $region68: #{tpu_custom_call.1} parent=51 // pred_fallthru
            _
          %288 = shalt.err (0)
          %s290 = sshll.u32 %s281, 4
          %s291 = int_to_ptr.vmem [resolvable:$true] %s290
          %293 = dma.hbm_to_vmem [thread:$0]  %s280, 16, %s291, %s282
          %s294 = sld [smem:[#allocation7 + $0x4]]
          %s295 = smul.addr %s294, 16
          %s296 = scalar_lea.hbm %s1, %s295
          %s297 = scalar_lea.vmem [#allocation2], 4
          %s298 = scalar_lea.sflag [#allocation5], 4
          // Predicated region
          $region69: #{tpu_custom_call.1} parent=51 // pred_check
            _
          $region70: #{tpu_custom_call.1} parent=51 // pred_check_branch
            %300 = sbr.rel target = $region72
          $region71: #{tpu_custom_call.1} parent=51 // pred_region
            %301 = sst [smem:[#allocation16]] [#allocation25]
            %302 = sst [smem:[#allocation17]] [#allocation24]
          $region72: #{tpu_custom_call.1} parent=51 // pred_fallthru
            _
          %304 = shalt.err (0)
          %s306 = sshll.u32 %s297, 4
          %s307 = int_to_ptr.vmem [resolvable:$true] %s306
          %309 = dma.hbm_to_vmem [thread:$0]  %s296, 16, %s307, %s298
          %s310 = sld [smem:[#allocation7 + $0x5]]
          %s311 = smul.addr %s310, 16
          %s312 = scalar_lea.hbm %s1, %s311
          %s313 = scalar_lea.vmem [#allocation2], 5
          %s314 = scalar_lea.sflag [#allocation5], 5
          // Predicated region
          $region73: #{tpu_custom_call.1} parent=51 // pred_check
            _
          $region74: #{tpu_custom_call.1} parent=51 // pred_check_branch
            %316 = sbr.rel target = $region76
          $region75: #{tpu_custom_call.1} parent=51 // pred_region
            %317 = sst [smem:[#allocation16]] [#allocation27]
            %318 = sst [smem:[#allocation17]] [#allocation26]
          $region76: #{tpu_custom_call.1} parent=51 // pred_fallthru
            _
          %320 = shalt.err (0)
          %s322 = sshll.u32 %s313, 4
          %s323 = int_to_ptr.vmem [resolvable:$true] %s322
          %325 = dma.hbm_to_vmem [thread:$0]  %s312, 16, %s323, %s314
          %s326 = sld [smem:[#allocation7 + $0x6]]
          %s327 = smul.addr %s326, 16
          %s328 = scalar_lea.hbm %s1, %s327
          %s329 = scalar_lea.vmem [#allocation2], 6
          %s330 = scalar_lea.sflag [#allocation5], 6
          // Predicated region
          $region77: #{tpu_custom_call.1} parent=51 // pred_check
            _
          $region78: #{tpu_custom_call.1} parent=51 // pred_check_branch
            %332 = sbr.rel target = $region80
          $region79: #{tpu_custom_call.1} parent=51 // pred_region
            %333 = sst [smem:[#allocation16]] [#allocation29]
            %334 = sst [smem:[#allocation17]] [#allocation28]
          $region80: #{tpu_custom_call.1} parent=51 // pred_fallthru
            _
          %336 = shalt.err (0)
          %s338 = sshll.u32 %s329, 4
          %s339 = int_to_ptr.vmem [resolvable:$true] %s338
          %341 = dma.hbm_to_vmem [thread:$0]  %s328, 16, %s339, %s330
          %s342 = sld [smem:[#allocation7 + $0x7]]
          %s343 = smul.addr %s342, 16
          %s344 = scalar_lea.hbm %s1, %s343
          %s345 = scalar_lea.vmem [#allocation2], 7
          %s346 = scalar_lea.sflag [#allocation5], 7
          // Predicated region
          $region81: #{tpu_custom_call.1} parent=51 // pred_check
            _
          $region82: #{tpu_custom_call.1} parent=51 // pred_check_branch
            %348 = sbr.rel target = $region84
          $region83: #{tpu_custom_call.1} parent=51 // pred_region
            %349 = sst [smem:[#allocation16]] [#allocation31]
            %350 = sst [smem:[#allocation17]] [#allocation30]
          $region84: #{tpu_custom_call.1} parent=51 // pred_fallthru
            _
          %352 = shalt.err (0)
          %s354 = sshll.u32 %s345, 4
          %s355 = int_to_ptr.vmem [resolvable:$true] %s354
          %357 = dma.hbm_to_vmem [thread:$0]  %s344, 16, %s355, %s346
          %s358 = smul.u32 1, 1
          %s359 = sshll.u32 %s358, 4
          %360 = dma.done [#allocation5], %s359
          %s361 = sshll.u32 %s358, 4
          %362 = dma.done %s250, %s361
          %s363 = sshll.u32 %s358, 4
          %364 = dma.done %s266, %s363
          %s365 = sshll.u32 %s358, 4
          %366 = dma.done %s282, %s365
          %s367 = sshll.u32 %s358, 4
          %368 = dma.done %s298, %s367
          %s369 = sshll.u32 %s358, 4
          %370 = dma.done %s314, %s369
          %s371 = sshll.u32 %s358, 4
          %372 = dma.done %s330, %s371
          %s373 = sshll.u32 %s358, 4
          %374 = dma.done %s346, %s373
          %v375 = vld [vmem:[#allocation2] sm:$0xff]
          %v376 = vpack.c.bf16 %v375, %v375
          %v377 = vld [vmem:[#allocation8] sm:$0xff]
          %v378 = vld [vmem:[#allocation8 + $0x8] sm:$0xf]
          %v379 = vld [vmem:[#allocation8 + $0xc] sm:$0xff]
          %v380 = vld [vmem:[#allocation8 + $0x14] sm:$0xf]
          %v381 = vld [vmem:[#allocation8 + $0x18] sm:$0xff]
          %v382 = vld [vmem:[#allocation8 + $0x20] sm:$0xf]
          %v383 = vld [vmem:[#allocation8 + $0x24] sm:$0xff]
          %v384 = vld [vmem:[#allocation8 + $0x2c] sm:$0xf]
          %v385 = vld [vmem:[#allocation8 + $0x30] sm:$0xff]
          %v386 = vld [vmem:[#allocation8 + $0x38] sm:$0xf]
          %v387 = vld [vmem:[#allocation8 + $0x3c] sm:$0xff]
          %v388 = vld [vmem:[#allocation8 + $0x44] sm:$0xf]
          %v389 = vld [vmem:[#allocation8 + $0x48] sm:$0xff]
          %v390 = vld [vmem:[#allocation8 + $0x50] sm:$0xf]
          %v391 = vld [vmem:[#allocation8 + $0x54] sm:$0xff]
          %v392 = vld [vmem:[#allocation8 + $0x5c] sm:$0xf]
          %v393 = vld [vmem:[#allocation8 + $0x60] sm:$0xff]
          %v394 = vld [vmem:[#allocation8 + $0x68] sm:$0xf]
          %v395 = vld [vmem:[#allocation8 + $0x6c] sm:$0xff]
          %v396 = vld [vmem:[#allocation8 + $0x74] sm:$0xf]
          %v397 = vld [vmem:[#allocation8 + $0x78] sm:$0xff]
          %v398 = vld [vmem:[#allocation8 + $0x80] sm:$0xf]
          %v399 = vld [vmem:[#allocation8 + $0x84] sm:$0xff]
          %v400 = vld [vmem:[#allocation8 + $0x8c] sm:$0xf]
          %v401 = vld [vmem:[#allocation8 + $0x90] sm:$0xff]
          %v402 = vld [vmem:[#allocation8 + $0x98] sm:$0xf]
          %v403 = vld [vmem:[#allocation8 + $0x9c] sm:$0xff]
          %v404 = vld [vmem:[#allocation8 + $0xa4] sm:$0xf]
          %v405 = vld [vmem:[#allocation8 + $0xa8] sm:$0xff]
          %v406 = vld [vmem:[#allocation8 + $0xb0] sm:$0xf]
          %v407 = vld [vmem:[#allocation8 + $0xb4] sm:$0xff]
          %v408 = vld [vmem:[#allocation8 + $0xbc] sm:$0xf]
          %v409 = vld [vmem:[%s4] sm:$0x7]
          %v411 = vlaneseq
          %v412 = vshrl.u32 %v411, 7
          %v413 = vsub.s32 0, %v412
          %v414 = vrot.slane %v409, %v413
          %v415 = vlaneseq
          %v416 = vshrl.u32 %v415, 7
          %v417 = vsub.s32 1, %v416
          %v418 = vrot.slane %v409, %v417
          %v419 = vlaneseq
          %v420 = vshrl.u32 %v419, 7
          %v421 = vsub.s32 2, %v420
          %v422 = vrot.slane %v409, %v421
          %v458 = vunpack.c.l.b16 %v377
          %v459 = vunpack.c.h.b16 %v377
          %v460 = vunpack.c.l.b16 %v378
          %v461 = vunpack.c.l.b16 %v379
          %v462 = vunpack.c.h.b16 %v379
          %v463 = vunpack.c.l.b16 %v380
          %v464 = vunpack.c.l.b16 %v381
          %v465 = vunpack.c.h.b16 %v381
          %v466 = vunpack.c.l.b16 %v382
          %v467 = vunpack.c.l.b16 %v383
          %v468 = vunpack.c.h.b16 %v383
          %v469 = vunpack.c.l.b16 %v384
          %v470 = vunpack.c.l.b16 %v385
          %v471 = vunpack.c.h.b16 %v385
          %v472 = vunpack.c.l.b16 %v386
          %v473 = vunpack.c.l.b16 %v387
          %v474 = vunpack.c.h.b16 %v387
          %v475 = vunpack.c.l.b16 %v388
          %v476 = vunpack.c.l.b16 %v389
          %v477 = vunpack.c.h.b16 %v389
          %v478 = vunpack.c.l.b16 %v390
          %v479 = vunpack.c.l.b16 %v391
          %v480 = vunpack.c.h.b16 %v391
          %v481 = vunpack.c.l.b16 %v392
          %v482 = vunpack.c.l.b16 %v393
          %v483 = vunpack.c.h.b16 %v393
          %v484 = vunpack.c.l.b16 %v394
          %v485 = vunpack.c.l.b16 %v395
          %v486 = vunpack.c.h.b16 %v395
          %v487 = vunpack.c.l.b16 %v396
          %v488 = vunpack.c.l.b16 %v397
          %v489 = vunpack.c.h.b16 %v397
          %v490 = vunpack.c.l.b16 %v398
          %v491 = vunpack.c.l.b16 %v399
          %v492 = vunpack.c.h.b16 %v399
          %v493 = vunpack.c.l.b16 %v400
          %v494 = vunpack.c.l.b16 %v401
          %v495 = vunpack.c.h.b16 %v401
          %v496 = vunpack.c.l.b16 %v402
          %v497 = vunpack.c.l.b16 %v403
          %v498 = vunpack.c.h.b16 %v403
          %v499 = vunpack.c.l.b16 %v404
          %v500 = vunpack.c.l.b16 %v405
          %v501 = vunpack.c.h.b16 %v405
          %v502 = vunpack.c.l.b16 %v406
          %v503 = vunpack.c.l.b16 %v407
          %v504 = vunpack.c.h.b16 %v407
          %v505 = vunpack.c.l.b16 %v408
          %v506 = vpack.c.b16 %v461, %v458
          %v507 = vpack.c.b16 %v462, %v459
          %v508 = vpack.c.b16 %v463, %v460
          %v509 = vpack.c.b16 %v467, %v464
          %v510 = vpack.c.b16 %v468, %v465
          %v511 = vpack.c.b16 %v469, %v466
          %v512 = vpack.c.b16 %v473, %v470
          %v513 = vpack.c.b16 %v474, %v471
          %v514 = vpack.c.b16 %v475, %v472
          %v515 = vpack.c.b16 %v479, %v476
          %v516 = vpack.c.b16 %v480, %v477
          %v517 = vpack.c.b16 %v481, %v478
          %v518 = vpack.c.b16 %v485, %v482
          %v519 = vpack.c.b16 %v486, %v483
          %v520 = vpack.c.b16 %v487, %v484
          %v521 = vpack.c.b16 %v491, %v488
          %v522 = vpack.c.b16 %v492, %v489
          %v523 = vpack.c.b16 %v493, %v490
          %v524 = vpack.c.b16 %v497, %v494
          %v525 = vpack.c.b16 %v498, %v495
          %v526 = vpack.c.b16 %v499, %v496
          %v527 = vpack.c.b16 %v503, %v500
          %v528 = vpack.c.b16 %v504, %v501
          %v529 = vpack.c.b16 %v505, %v502
          %554 = vmatprep.subr.bf16.mxu0 %v528
          %555 = vmatpush1.bf16.msra.mxu0 %v527
          %556 = vmatprep.subr.bf16.mxu0 %v525
          %557 = vmatpush1.bf16.msra.mxu0 %v524
          %558 = vmatprep.subr.bf16.mxu0 %v522
          %559 = vmatpush1.bf16.msra.mxu0 %v521
          %560 = vmatprep.subr.bf16.mxu0 %v519
          %561 = vmatpush1.bf16.msra.mxu0 %v518
          %562 = vmatprep.subr.bf16.mxu0 %v516
          %563 = vmatpush1.bf16.msra.mxu0 %v515
          %564 = vmatprep.subr.bf16.mxu0 %v513
          %565 = vmatpush1.bf16.msra.mxu0 %v512
          %566 = vmatprep.subr.bf16.mxu0 %v510
          %567 = vmatpush1.bf16.msra.mxu0 %v509
          %568 = vmatprep.subr.bf16.mxu0 %v507
          %569 = vmatpush1.bf16.msra.mxu0 %v506
          %570 = vmatprep.subr.bf16.mxu0 0
          %571 = vmatpush2.bf16.msra.mxu0 0
          %572 = vmatprep.subr.bf16.mxu0 0
          %573 = vmatpush2.bf16.msra.mxu0 0
          %574 = vmatprep.subr.bf16.mxu0 0
          %575 = vmatpush2.bf16.msra.mxu0 0
          %576 = vmatprep.subr.bf16.mxu0 0
          %577 = vmatpush2.bf16.msra.mxu0 0
          %578 = vmatprep.subr.bf16.mxu0 0
          %579 = vmatpush2.bf16.msra.mxu0 0
          %580 = vmatprep.subr.bf16.mxu0 0
          %581 = vmatpush2.bf16.msra.mxu0 0
          %582 = vmatprep.subr.bf16.mxu0 0
          %583 = vmatpush2.bf16.msra.mxu0 0
          %584 = vmatprep.subr.bf16.mxu0 0
          %585 = vmatpush2.bf16.msra.mxu0 0
          %586 = vmatprep.mubr.bf16.mxu0 0
          %587 = vmatmul.mubr.bf16.gmra.mxu0 %v376
          %v588 = vpop.f32.mrf.mxu0
          %v589 = vadd.f32 %v414, %v588
          %v590 = vpop.f32.mrf.mxu0
          %v591 = vadd.f32 %v418, %v590
          %v592 = vpop.f32.mrf.mxu0
          %v593 = vpop.f32.mrf.mxu0
          %594 = vdwg.mxu0
          %595 = vmatprep.subr.bf16.mxu0 0
          %596 = vmatpush1.bf16.msra.mxu0 %v529
          %597 = vmatprep.subr.bf16.mxu0 0
          %598 = vmatpush1.bf16.msra.mxu0 %v526
          %599 = vmatprep.subr.bf16.mxu0 0
          %600 = vmatpush1.bf16.msra.mxu0 %v523
          %601 = vmatprep.subr.bf16.mxu0 0
          %602 = vmatpush1.bf16.msra.mxu0 %v520
          %603 = vmatprep.subr.bf16.mxu0 0
          %604 = vmatpush1.bf16.msra.mxu0 %v517
          %605 = vmatprep.subr.bf16.mxu0 0
          %606 = vmatpush1.bf16.msra.mxu0 %v514
          %607 = vmatprep.subr.bf16.mxu0 0
          %608 = vmatpush1.bf16.msra.mxu0 %v511
          %609 = vmatprep.subr.bf16.mxu0 0
          %610 = vmatpush1.bf16.msra.mxu0 %v508
          %611 = vmatprep.subr.bf16.mxu0 0
          %612 = vmatpush2.bf16.msra.mxu0 0
          %613 = vmatprep.subr.bf16.mxu0 0
          %614 = vmatpush2.bf16.msra.mxu0 0
          %615 = vmatprep.subr.bf16.mxu0 0
          %616 = vmatpush2.bf16.msra.mxu0 0
          %617 = vmatprep.subr.bf16.mxu0 0
          %618 = vmatpush2.bf16.msra.mxu0 0
          %619 = vmatprep.subr.bf16.mxu0 0
          %620 = vmatpush2.bf16.msra.mxu0 0
          %621 = vmatprep.subr.bf16.mxu0 0
          %622 = vmatpush2.bf16.msra.mxu0 0
          %623 = vmatprep.subr.bf16.mxu0 0
          %624 = vmatpush2.bf16.msra.mxu0 0
          %625 = vmatprep.subr.bf16.mxu0 0
          %626 = vmatpush2.bf16.msra.mxu0 0
          %627 = vmatprep.mubr.bf16.mxu0 0
          %628 = vmatmul.mubr.bf16.gmra.mxu0 %v376
          %v629 = vpop.f32.mrf.mxu0
          %v630 = vadd.f32 %v422, %v629
          %v631 = vpop.f32.mrf.mxu0
          %v632 = vpop.f32.mrf.mxu0
          %v633 = vpop.f32.mrf.mxu0
          %634 = vdwg.mxu0
          %635 = vst [vmem:[#allocation3] sm:$0xff] %v589
          %636 = vst [vmem:[#allocation3 + $0x8] sm:$0xff] %v591
          %637 = vst [vmem:[#allocation3 + $0x10] sm:$0xff] %v630
          %v638 = vld [vmem:[%s6] sm:$0x1]
          %639 = vst [vmem:[#allocation4] sm:$0x1] %v638
        $region52: #{tpu_custom_call.1} parent=39 // pred_fallthru
          _
        %v640 = vld [vmem:[#allocation4] sm:$0x1]
        %v641 = vpack.c.bf16 %v640, %v640
        %v642 = vld [vmem:[#allocation11] sm:$0xff]
        %v643 = vld [vmem:[#allocation11 + $0x8] sm:$0xf]
        %v644 = vld [vmem:[#allocation11 + $0xc] sm:$0xff]
        %v645 = vld [vmem:[#allocation11 + $0x14] sm:$0xf]
        %v646 = vld [vmem:[#allocation11 + $0x18] sm:$0xff]
        %v647 = vld [vmem:[#allocation11 + $0x20] sm:$0xf]
        %v648 = vld [vmem:[#allocation11 + $0x24] sm:$0xff]
        %v649 = vld [vmem:[#allocation11 + $0x2c] sm:$0xf]
        %v650 = vld [vmem:[#allocation11 + $0x30] sm:$0xff]
        %v651 = vld [vmem:[#allocation11 + $0x38] sm:$0xf]
        %v652 = vld [vmem:[#allocation11 + $0x3c] sm:$0xff]
        %v653 = vld [vmem:[#allocation11 + $0x44] sm:$0xf]
        %v654 = vld [vmem:[#allocation11 + $0x48] sm:$0xff]
        %v655 = vld [vmem:[#allocation11 + $0x50] sm:$0xf]
        %v656 = vld [vmem:[#allocation11 + $0x54] sm:$0xff]
        %v657 = vld [vmem:[#allocation11 + $0x5c] sm:$0xf]
        %v658 = vld [vmem:[#allocation11 + $0x60] sm:$0xff]
        %v659 = vld [vmem:[#allocation11 + $0x68] sm:$0xf]
        %v660 = vld [vmem:[#allocation11 + $0x6c] sm:$0xff]
        %v661 = vld [vmem:[#allocation11 + $0x74] sm:$0xf]
        %v662 = vld [vmem:[#allocation11 + $0x78] sm:$0xff]
        %v663 = vld [vmem:[#allocation11 + $0x80] sm:$0xf]
        %v664 = vld [vmem:[#allocation11 + $0x84] sm:$0xff]
        %v665 = vld [vmem:[#allocation11 + $0x8c] sm:$0xf]
        %v666 = vld [vmem:[#allocation11 + $0x90] sm:$0xff]
        %v667 = vld [vmem:[#allocation11 + $0x98] sm:$0xf]
        %v668 = vld [vmem:[#allocation11 + $0x9c] sm:$0xff]
        %v669 = vld [vmem:[#allocation11 + $0xa4] sm:$0xf]
        %v670 = vld [vmem:[#allocation11 + $0xa8] sm:$0xff]
        %v671 = vld [vmem:[#allocation11 + $0xb0] sm:$0xf]
        %v672 = vld [vmem:[#allocation11 + $0xb4] sm:$0xff]
        %v673 = vld [vmem:[#allocation11 + $0xbc] sm:$0xf]
        %v706 = vunpack.c.l.b16 %v642
        %v707 = vunpack.c.h.b16 %v642
        %v708 = vunpack.c.l.b16 %v643
        %v709 = vunpack.c.l.b16 %v644
        %v710 = vunpack.c.h.b16 %v644
        %v711 = vunpack.c.l.b16 %v645
        %v712 = vunpack.c.l.b16 %v646
        %v713 = vunpack.c.h.b16 %v646
        %v714 = vunpack.c.l.b16 %v647
        %v715 = vunpack.c.l.b16 %v648
        %v716 = vunpack.c.h.b16 %v648
        %v717 = vunpack.c.l.b16 %v649
        %v718 = vunpack.c.l.b16 %v650
        %v719 = vunpack.c.h.b16 %v650
        %v720 = vunpack.c.l.b16 %v651
        %v721 = vunpack.c.l.b16 %v652
        %v722 = vunpack.c.h.b16 %v652
        %v723 = vunpack.c.l.b16 %v653
        %v724 = vunpack.c.l.b16 %v654
        %v725 = vunpack.c.h.b16 %v654
        %v726 = vunpack.c.l.b16 %v655
        %v727 = vunpack.c.l.b16 %v656
        %v728 = vunpack.c.h.b16 %v656
        %v729 = vunpack.c.l.b16 %v657
        %v730 = vunpack.c.l.b16 %v658
        %v731 = vunpack.c.h.b16 %v658
        %v732 = vunpack.c.l.b16 %v659
        %v733 = vunpack.c.l.b16 %v660
        %v734 = vunpack.c.h.b16 %v660
        %v735 = vunpack.c.l.b16 %v661
        %v736 = vunpack.c.l.b16 %v662
        %v737 = vunpack.c.h.b16 %v662
        %v738 = vunpack.c.l.b16 %v663
        %v739 = vunpack.c.l.b16 %v664
        %v740 = vunpack.c.h.b16 %v664
        %v741 = vunpack.c.l.b16 %v665
        %v742 = vunpack.c.l.b16 %v666
        %v743 = vunpack.c.h.b16 %v666
        %v744 = vunpack.c.l.b16 %v667
        %v745 = vunpack.c.l.b16 %v668
        %v746 = vunpack.c.h.b16 %v668
        %v747 = vunpack.c.l.b16 %v669
        %v748 = vunpack.c.l.b16 %v670
        %v749 = vunpack.c.h.b16 %v670
        %v750 = vunpack.c.l.b16 %v671
        %v751 = vunpack.c.l.b16 %v672
        %v752 = vunpack.c.h.b16 %v672
        %v753 = vunpack.c.l.b16 %v673
        %v754 = vpack.c.b16 %v709, %v706
        %v755 = vpack.c.b16 %v710, %v707
        %v756 = vpack.c.b16 %v711, %v708
        %v757 = vpack.c.b16 %v715, %v712
        %v758 = vpack.c.b16 %v716, %v713
        %v759 = vpack.c.b16 %v717, %v714
        %v760 = vpack.c.b16 %v721, %v718
        %v761 = vpack.c.b16 %v722, %v719
        %v762 = vpack.c.b16 %v723, %v720
        %v763 = vpack.c.b16 %v727, %v724
        %v764 = vpack.c.b16 %v728, %v725
        %v765 = vpack.c.b16 %v729, %v726
        %v766 = vpack.c.b16 %v733, %v730
        %v767 = vpack.c.b16 %v734, %v731
        %v768 = vpack.c.b16 %v735, %v732
        %v769 = vpack.c.b16 %v739, %v736
        %v770 = vpack.c.b16 %v740, %v737
        %v771 = vpack.c.b16 %v741, %v738
        %v772 = vpack.c.b16 %v745, %v742
        %v773 = vpack.c.b16 %v746, %v743
        %v774 = vpack.c.b16 %v747, %v744
        %v775 = vpack.c.b16 %v751, %v748
        %v776 = vpack.c.b16 %v752, %v749
        %v777 = vpack.c.b16 %v753, %v750
        %802 = vmatprep.subr.bf16.mxu0 %v776
        %803 = vmatpush1.bf16.msra.mxu0 %v775
        %804 = vmatprep.subr.bf16.mxu0 %v773
        %805 = vmatpush1.bf16.msra.mxu0 %v772
        %806 = vmatprep.subr.bf16.mxu0 %v770
        %807 = vmatpush1.bf16.msra.mxu0 %v769
        %808 = vmatprep.subr.bf16.mxu0 %v767
        %809 = vmatpush1.bf16.msra.mxu0 %v766
        %810 = vmatprep.subr.bf16.mxu0 %v764
        %811 = vmatpush1.bf16.msra.mxu0 %v763
        %812 = vmatprep.subr.bf16.mxu0 %v761
        %813 = vmatpush1.bf16.msra.mxu0 %v760
        %814 = vmatprep.subr.bf16.mxu0 %v758
        %815 = vmatpush1.bf16.msra.mxu0 %v757
        %816 = vmatprep.subr.bf16.mxu0 %v755
        %817 = vmatpush1.bf16.msra.mxu0 %v754
        %818 = vmatprep.subr.bf16.mxu0 0
        %819 = vmatpush2.bf16.msra.mxu0 0
        %820 = vmatprep.subr.bf16.mxu0 0
        %821 = vmatpush2.bf16.msra.mxu0 0
        %822 = vmatprep.subr.bf16.mxu0 0
        %823 = vmatpush2.bf16.msra.mxu0 0
        %824 = vmatprep.subr.bf16.mxu0 0
        %825 = vmatpush2.bf16.msra.mxu0 0
        %826 = vmatprep.subr.bf16.mxu0 0
        %827 = vmatpush2.bf16.msra.mxu0 0
        %828 = vmatprep.subr.bf16.mxu0 0
        %829 = vmatpush2.bf16.msra.mxu0 0
        %830 = vmatprep.subr.bf16.mxu0 0
        %831 = vmatpush2.bf16.msra.mxu0 0
        %832 = vmatprep.subr.bf16.mxu0 0
        %833 = vmatpush2.bf16.msra.mxu0 0
        %834 = vmatprep.mubr.bf16.mxu0 0
        %835 = vmatmul.mubr.bf16.gmra.mxu0 %v641
        %v836 = vpop.f32.mrf.mxu0
        %v837 = vadd.f32 0.0, %v836
        %v838 = vpop.f32.mrf.mxu0
        %v839 = vadd.f32 0.0, %v838
        %v840 = vpop.f32.mrf.mxu0
        %v841 = vpop.f32.mrf.mxu0
        %842 = vdwg.mxu0
        %843 = vmatprep.subr.bf16.mxu0 0
        %844 = vmatpush1.bf16.msra.mxu0 %v777
        %845 = vmatprep.subr.bf16.mxu0 0
        %846 = vmatpush1.bf16.msra.mxu0 %v774
        %847 = vmatprep.subr.bf16.mxu0 0
        %848 = vmatpush1.bf16.msra.mxu0 %v771
        %849 = vmatprep.subr.bf16.mxu0 0
        %850 = vmatpush1.bf16.msra.mxu0 %v768
        %851 = vmatprep.subr.bf16.mxu0 0
        %852 = vmatpush1.bf16.msra.mxu0 %v765
        %853 = vmatprep.subr.bf16.mxu0 0
        %854 = vmatpush1.bf16.msra.mxu0 %v762
        %855 = vmatprep.subr.bf16.mxu0 0
        %856 = vmatpush1.bf16.msra.mxu0 %v759
        %857 = vmatprep.subr.bf16.mxu0 0
        %858 = vmatpush1.bf16.msra.mxu0 %v756
        %859 = vmatprep.subr.bf16.mxu0 0
        %860 = vmatpush2.bf16.msra.mxu0 0
        %861 = vmatprep.subr.bf16.mxu0 0
        %862 = vmatpush2.bf16.msra.mxu0 0
        %863 = vmatprep.subr.bf16.mxu0 0
        %864 = vmatpush2.bf16.msra.mxu0 0
        %865 = vmatprep.subr.bf16.mxu0 0
        %866 = vmatpush2.bf16.msra.mxu0 0
        %867 = vmatprep.subr.bf16.mxu0 0
        %868 = vmatpush2.bf16.msra.mxu0 0
        %869 = vmatprep.subr.bf16.mxu0 0
        %870 = vmatpush2.bf16.msra.mxu0 0
        %871 = vmatprep.subr.bf16.mxu0 0
        %872 = vmatpush2.bf16.msra.mxu0 0
        %873 = vmatprep.subr.bf16.mxu0 0
        %874 = vmatpush2.bf16.msra.mxu0 0
        %875 = vmatprep.mubr.bf16.mxu0 0
        %876 = vmatmul.mubr.bf16.gmra.mxu0 %v641
        %v877 = vpop.f32.mrf.mxu0
        %v878 = vadd.f32 0.0, %v877
        %v879 = vpop.f32.mrf.mxu0
        %v880 = vpop.f32.mrf.mxu0
        %v881 = vpop.f32.mrf.mxu0
        %882 = vdwg.mxu0
        %s883 = sshra.s32 %s25, 3
        %s884 = sand.u32 %s25, 7
        %s885 = sshra.s32 %s25, 3
        %s886 = sand.u32 %s25, 7
        %s887 = smul.u32 %s883, 3
        %s888 = smul.u32 %s887, 8
        %s889 = sadd.s32 %s888, %s886
        %s890 = scalar_lea.vmem [#allocation3], %s889
        %v891 = vld [vmem:[%s890] ss:$8 sm:$0x7]
        %v892 = vadd.f32 %v891, %v837
        %v893 = vxor.u32 %v892, 2147483648
        %v894 = vmul.f32 %v893, 1.442695
        %v895 = vpow.pop %v894
        %v896 = vadd.f32 %v895, 1.0
        %v897 = vrcp.pop %v896
        %v898 = vmul.f32 1.0, %v897
        %v900 = vrot.slane %v891, 1
        %v902 = vadd.f32 %v900, %v839
        %v903 = vxor.u32 %v902, 2147483648
        %v904 = vmul.f32 %v903, 1.442695
        %v905 = vpow.pop %v904
        %v906 = vadd.f32 %v905, 1.0
        %v907 = vrcp.pop %v906
        %v908 = vmul.f32 1.0, %v907
        %v909 = vld [vmem:[%s5] sm:$0x1]
        %v910 = vadd.f32 %v878, %v909
        %v911 = vmul.f32 %v898, %v910
        %v912 = vrot.slane %v891, 2
        %v914 = vadd.f32 %v912, %v911
        %v915 = vtanh.pop %v914
        %v916 = vsub.f32 1.0, %v908
        %v917 = vmul.f32 %v916, %v915
        %v918 = vmul.f32 %v908, %v640
        %v919 = vadd.f32 %v917, %v918
        %920 = vst [vmem:[#allocation4] sm:$0x1] %v919
        %s921 = scalar_lea.vmem [#allocation13], %s25
        %922 = vst [vmem:[%s921] sm:$0x1] %v919
        // Predicated region
        $region85: #{tpu_custom_call.1} parent=39 // pred_check
          %p923 = pneg %p143
        $region86: #{tpu_custom_call.1} parent=39 // pred_check_branch
          %925 = sbr.rel (%p923) target = $region88
        $region87: #{tpu_custom_call.1} parent=39 // pred_region
          %s927 = ssub.s32 128, 128
          %928 = vsyncadd [#allocation10], %s927
          %s930 = sshll.u32 [#allocation13], 4
          %s931 = int_to_ptr.vmem [resolvable:$true] %s930
          %933 = dma.vmem_to_hbm [thread:$0]  %s931, 128, %s7, [#allocation10]
        $region88: #{tpu_custom_call.1} parent=39 // pred_fallthru
          _
        // Predicated region
        $region89: #{tpu_custom_call.1} parent=39 // pred_check
          %p934 = pneg %p143
        $region90: #{tpu_custom_call.1} parent=39 // pred_check_branch
          %936 = sbr.rel (%p934) target = $region92
        $region91: #{tpu_custom_call.1} parent=39 // pred_region
          %937 = dma.done [#allocation10], 128
        $region92: #{tpu_custom_call.1} parent=39 // pred_fallthru
          _
      $region40: #{tpu_custom_call.1} parent=5 // pred_fallthru
        _
      %p938 = scmp.le.s32.totalorder 2, %s20
      // Predicated region
      $region93: #{tpu_custom_call.1} parent=5 // pred_check
        %p939 = pneg %p938
      $region94: #{tpu_custom_call.1} parent=5 // pred_check_branch
        %941 = sbr.rel (%p939) target = $region96
      $region95: #{tpu_custom_call.1} parent=5 // pred_region
        %s942 = ssub.s32 %s20, 2
      $region96: #{tpu_custom_call.1} parent=5 // pred_fallthru
        _
    $region6: #{tpu_custom_call.1} parent=1 // loop_footer
      %s24 = sadd.s32 1, %s20
    $region7: #{tpu_custom_call.1} parent=1 // loop_footer_branch
      %19 = sbr.rel target = $region3
    $region8: #{tpu_custom_call.1} parent=1 // loop_exit
      _
    %943 = vsyncpa [#allocation9], 1
    %s944 = scalar_lea.sflag [#allocation9], 1
    %945 = vsyncpa %s944, 1
    %946 = vsyncpa [#allocation12], 1
    %947 = vsyncpa [#allocation10], 1
    %s948 = scalar_lea.sflag [#allocation10], 1
    %949 = vsyncpa %s948, 1
  %950 = vsyncmov [#allocation5]
  %s951 = vpop.sfrf %950
  %p952 = scmp.eq.s32.totalorder %s951, 0
  %p953 = pneg %p952
  %955 = shalt.err (%p953)
  %s956 = scalar_lea.sflag [#allocation5], 1
  %957 = vsyncmov %s956
  %s958 = vpop.sfrf %957
  %p959 = scmp.eq.s32.totalorder %s958, 0
  %p960 = pneg %p959
  %962 = shalt.err (%p960)
  %s963 = scalar_lea.sflag [#allocation5], 2
  %964 = vsyncmov %s963
  %s965 = vpop.sfrf %964
  %p966 = scmp.eq.s32.totalorder %s965, 0
  %p967 = pneg %p966
  %969 = shalt.err (%p967)
  %s970 = scalar_lea.sflag [#allocation5], 3
  %971 = vsyncmov %s970
  %s972 = vpop.sfrf %971
  %p973 = scmp.eq.s32.totalorder %s972, 0
  %p974 = pneg %p973
  %976 = shalt.err (%p974)
  %s977 = scalar_lea.sflag [#allocation5], 4
  %978 = vsyncmov %s977
  %s979 = vpop.sfrf %978
  %p980 = scmp.eq.s32.totalorder %s979, 0
  %p981 = pneg %p980
  %983 = shalt.err (%p981)
  %s984 = scalar_lea.sflag [#allocation5], 5
  %985 = vsyncmov %s984
  %s986 = vpop.sfrf %985
  %p987 = scmp.eq.s32.totalorder %s986, 0
  %p988 = pneg %p987
  %990 = shalt.err (%p988)
  %s991 = scalar_lea.sflag [#allocation5], 6
  %992 = vsyncmov %s991
  %s993 = vpop.sfrf %992
  %p994 = scmp.eq.s32.totalorder %s993, 0
  %p995 = pneg %p994
  %997 = shalt.err (%p995)
  %s998 = scalar_lea.sflag [#allocation5], 7
  %999 = vsyncmov %s998
  %s1000 = vpop.sfrf %999
  %p1001 = scmp.eq.s32.totalorder %s1000, 0
  %p1002 = pneg %p1001
  %1004 = shalt.err (%p1002)

</llo_original>
